<compile_context>
chip_gen: v6e
topology: v6e:2x2x1
jax: 0.10.0
libtpu: 0.0.40
codegen_flags: <defaults>
</compile_context>

<pallas_src>
import math

import jax
import jax.numpy as jnp
import numpy as np
from jax import lax
from jax.experimental import pallas as pl
from jax.experimental.pallas import tpu as pltpu


def _layernorm(v, w, b, eps=1e-5):
    mu = jnp.mean(v, axis=-1, keepdims=True)
    var = jnp.mean((v - mu) ** 2, axis=-1, keepdims=True)
    return (v - mu) * lax.rsqrt(var + eps) * w + b


def _gelu(x):
    # OpenAI tanh-approx gelu, exact constants from the module.
    return 0.5 * x * (1.0 + jnp.tanh(0.7978845608028654 * x * (1.0 + 0.044715 * x * x)))


def _pick_tile(n, cap):
    """Largest 128-multiple tile <= cap that divides n."""
    for t in (512, 384, 256, 128):
        if t <= cap and n % t == 0:
            return t
    return n


def _vmem_cap_bytes():
    try:
        info = pltpu.get_tpu_info()
        cap = getattr(info, "vmem_capacity_bytes", None)
        if cap:
            return int(cap)
    except Exception:
        pass
    return 128 << 20


def _vmem_limit(block_bytes, cap):
    # ~2x for double-buffering plus headroom, clamped so the scoped limit is always
    # satisfiable on the current generation (v7x: 64 MiB per TensorCore).
    hi = cap - (8 << 20)
    return int(min(max(2 * block_bytes + (4 << 20), 32 << 20), hi))


def transformer_layer_pallas(x, mask, params, num_heads, matmul_dtype=jnp.bfloat16):
    B, S, D = x.shape
    H = num_heads
    assert D % H == 0, "hidden_dim must be divisible by num_heads"
    Dh = D // H
    assert S % 128 == 0 and D % 128 == 0, (
        "S and D must be 128-multiples (pad inputs); refusing the silent full-extent "
        "tile fallback that would blow the VMEM budget.")
    dscale = 1.0 / math.sqrt(Dh)

    mm = matmul_dtype
    itm = jnp.dtype(mm).itemsize
    use_approx = (mm != jnp.float32)

    (ln_in_w, ln_in_b, qkv_w, qkv_b, out_w, out_b,
     sw1_w, sw1_b, ln_out_w, ln_out_b,
     fc1_w, fc1_b, fc2_w, fc2_b, sw2_w, sw2_b) = params

    vmem_cap = _vmem_cap_bytes()
    big_vmem = vmem_cap > (96 << 20)          # v5e/v6e = 128 MiB, v7x = 64 MiB

    ts = _pick_tile(S, 512)                   # kernel-A sequence tile (weight reuse)
    tn = _pick_tile(3 * D, 512)               # kernel-A output-column tile
    tq = _pick_tile(S, 256)                   # flash query tile (fills 256-wide MXU)
    tk = _pick_tile(S, 512 if big_vmem else 256)   # flash KV tile (generation-aware)
    tm = _pick_tile(S, 256)                   # kernel-C sequence tile
    tf = _pick_tile(4 * D, 512)               # kernel-C FFN (hidden) tile

    # ------------------- kernel A: ln_in + QKV projection -------------------
    def qkv_kernel(x_ref, lnw_ref, lnb_ref, w_ref, b_ref, o_ref, ln_sc):
        # LayerNorm computed once per (batch, seq-tile) in f32, stored once in the matmul
        # dtype (no per-N-tile recast), reused across all N tiles.
        @pl.when(pl.program_id(2) == 0)
        def _():
            ln_sc[...] = _layernorm(x_ref[0], lnw_ref[0], lnb_ref[0]).astype(ln_sc.dtype)

        acc = jnp.dot(ln_sc[...], w_ref[...],
                      preferred_element_type=jnp.float32) + b_ref[0]
        o_ref[0] = acc.astype(o_ref.dtype)

    blk_a = ts * D * 4 + D * tn * itm + tn * 4 + ts * tn * itm + ts * D * itm
    qkv = pl.pallas_call(
        qkv_kernel,
        out_shape=jax.ShapeDtypeStruct((B, S, 3 * D), mm),
        grid=(B, S // ts, (3 * D) // tn),
        in_specs=[
            pl.BlockSpec((1, ts, D), lambda b, si, ni: (b, si, 0)),
            pl.BlockSpec((1, D), lambda b, si, ni: (0, 0)),
            pl.BlockSpec((1, D), lambda b, si, ni: (0, 0)),
            pl.BlockSpec((D, tn), lambda b, si, ni: (0, ni)),
            pl.BlockSpec((1, tn), lambda b, si, ni: (0, ni)),
        ],
        out_specs=pl.BlockSpec((1, ts, tn), lambda b, si, ni: (b, si, ni)),
        scratch_shapes=[pltpu.VMEM((ts, D), mm)],
        compiler_params=pltpu.CompilerParams(
            dimension_semantics=("parallel", "parallel", "arbitrary"),
            vmem_limit_bytes=_vmem_limit(blk_a, vmem_cap)),
        cost_estimate=pl.CostEstimate(
            flops=int(2 * B * S * D * 3 * D), transcendentals=0,
            bytes_accessed=int(B * S * D * 4 + B * (S // ts) * 3 * D * D * itm
                               + B * S * 3 * D * itm)),
    )(x, ln_in_w, ln_in_b, qkv_w.astype(mm), qkv_b)

    # -------- XLA glue: split heads into the (B, H, S, Dh) flash layout --------
    # TODO(synk): fold the head split into kernel B (column-offset BlockSpecs on the
    # (B,S,3D) slab + in-kernel pltpu.einshape) to drop this transpose round trip.
    def _split(t):
        return t.reshape(B, S, H, Dh).transpose(0, 2, 1, 3)

    q = _split(qkv[..., :D])
    k = _split(qkv[..., D:2 * D])
    v = _split(qkv[..., 2 * D:])
    mask_c = mask.astype(mm)   # binary mask: lossless in bf16, halves HBM traffic
    # TODO(synk): when the mask is known causal, generate it in-kernel from broadcasted
    # iota + compare (and skip fully-masked KV blocks) instead of streaming it from HBM.

    # -------- kernel B: flash attention (online softmax over KV tiles) --------
    def flash_kernel(q_ref, k_ref, v_ref, m_ref, o_ref, m_sc, l_sc, acc_sc):
        kv = pl.program_id(2)

        @pl.when(kv == 0)
        def _():
            m_sc[...] = jnp.full(m_sc.shape, -jnp.inf, dtype=m_sc.dtype)
            l_sc[...] = jnp.zeros_like(l_sc)
            acc_sc[...] = jnp.zeros_like(acc_sc)

        msk = m_ref[...].astype(jnp.float32)                       # (tq, tk)
        s = jnp.einsum("hqd,hkd->hqk", q_ref[0], k_ref[0],
                       preferred_element_type=jnp.float32)          # (H, tq, tk)
        # Fold 1/sqrt(Dh) into the mask pass; the cogview pb-relax global-max rescale is
        # a per-(b,h) constant shift and is exactly subsumed by the row-max subtraction.
        s = s * (msk * dscale) - (1.0 - msk) * 10000.0

        m_new = jnp.maximum(m_sc[...], s.max(axis=-1, keepdims=True))
        a = jnp.exp(m_sc[...] - m_new)                              # (H, tq, 1) f32
        s_shift = s - m_new
        if use_approx:
            p = jnp.exp(s_shift.astype(jnp.bfloat16))               # bf16 EUP path
            p_sum = jnp.sum(p.astype(jnp.float32), axis=-1, keepdims=True)
        else:
            p = jnp.exp(s_shift)
            p_sum = jnp.sum(p, axis=-1, keepdims=True)
        l_sc[...] = a * l_sc[...] + p_sum
        acc_sc[...] = a * acc_sc[...] + jnp.einsum(
            "hqk,hkd->hqd", p.astype(mm), v_ref[0],
            preferred_element_type=jnp.float32)
        m_sc[...] = m_new

        @pl.when(kv == pl.num_programs(2) - 1)
        def _():
            if use_approx:
                inv_l = pl.reciprocal(l_sc[...], approx=True)
            else:
                inv_l = 1.0 / l_sc[...]
            o_ref[0] = (acc_sc[...] * inv_l).astype(o_ref.dtype)

    nq, nkv = S // tq, S // tk
    blk_b = (2 * H * tq * Dh * itm + 2 * H * tk * Dh * itm + tq * tk * itm
             + H * tq * (Dh + 2) * 4 + 2 * H * tq * tk * 4)
    ctx = pl.pallas_call(
        flash_kernel,
        out_shape=jax.ShapeDtypeStruct((B, H, S, Dh), mm),
        grid=(B, nq, nkv),
        in_specs=[
            pl.BlockSpec((1, H, tq, Dh), lambda b, qi, ki: (b, 0, qi, 0)),
            pl.BlockSpec((1, H, tk, Dh), lambda b, qi, ki: (b, 0, ki, 0)),
            pl.BlockSpec((1, H, tk, Dh), lambda b, qi, ki: (b, 0, ki, 0)),
            pl.BlockSpec((tq, tk), lambda b, qi, ki: (qi, ki)),
        ],
        out_specs=pl.BlockSpec((1, H, tq, Dh), lambda b, qi, ki: (b, 0, qi, 0)),
        scratch_shapes=[pltpu.VMEM((H, tq, 1), jnp.float32),
                        pltpu.VMEM((H, tq, 1), jnp.float32),
                        pltpu.VMEM((H, tq, Dh), jnp.float32)],
        compiler_params=pltpu.CompilerParams(
            dimension_semantics=("parallel", "parallel", "arbitrary"),
            vmem_limit_bytes=_vmem_limit(blk_b, vmem_cap)),
        cost_estimate=pl.CostEstimate(
            flops=int(4 * B * S * S * D),
            transcendentals=int(B * H * S * S),
            bytes_accessed=int(2 * B * S * D * itm + 2 * B * nq * S * D * itm
                               + B * S * S * itm)),
    )(q, k, v, mask_c)

    # Merge heads once in XLA so the output projection is a single full-K matmul in
    # kernel C (no per-head K=Dh matmuls, no (H, tq, D) intermediate).
    ctx_dense = ctx.transpose(0, 2, 1, 3).reshape(B, S, D)

    out_wc = out_w.astype(mm)
    fc1_wc = fc1_w.astype(mm)
    fc2_wc = fc2_w.astype(mm)

    # -- kernel C: out_proj + sandwich LN + residual + ln_out + MLP (FFN-tiled) + LN + res --
    def mlp_kernel(ctx_ref, x_ref, ow_ref, ob_ref, s1w_ref, s1b_ref,
                   low_ref, lob_ref, f1w_ref, f1b_ref, f2w_ref, f2b_ref,
                   s2w_ref, s2b_ref, o_ref, x1_sc, ln2_sc, acc_sc):
        ffi = pl.program_id(2)

        @pl.when(ffi == 0)
        def _():
            # Collapsed full-K (tm, D) x (D, D) output projection: one MXU matmul.
            attn = jnp.dot(ctx_ref[0], ow_ref[...],
                           preferred_element_type=jnp.float32) + ob_ref[0]
            attn = _layernorm(attn, s1w_ref[0], s1b_ref[0])        # first sandwich LN
            x1 = x_ref[0] + attn
            x1_sc[...] = x1
            ln2_sc[...] = _layernorm(x1, low_ref[0], lob_ref[0]).astype(ln2_sc.dtype)
            acc_sc[...] = jnp.zeros_like(acc_sc)

        # FFN hidden dim streamed in tf-wide tiles: fc1 N-tile == fc2 K-tile.
        h1 = jnp.dot(ln2_sc[...], f1w_ref[...],
                     preferred_element_type=jnp.float32) + f1b_ref[0]
        g = _gelu(h1)
        acc_sc[...] += jnp.dot(g.astype(mm), f2w_ref[...],
                               preferred_element_type=jnp.float32)

        @pl.when(ffi == pl.num_programs(2) - 1)
        def _():
            mlp = acc_sc[...] + f2b_ref[0]
            mlp = _layernorm(mlp, s2w_ref[0], s2b_ref[0])          # second sandwich LN
            o_ref[0] = (x1_sc[...] + mlp).astype(o_ref.dtype)

    vec = lambda n: pl.BlockSpec((1, n), lambda b, si, fi: (0, 0))
    nff = (4 * D) // tf
    blk_c = (tm * D * itm + tm * D * 4 + D * D * itm + D * tf * itm + tf * D * itm
             + tm * tf * 4 + 2 * tm * D * 4 + tm * D * itm)
    out = pl.pallas_call(
        mlp_kernel,
        out_shape=jax.ShapeDtypeStruct((B, S, D), jnp.float32),
        grid=(B, S // tm, nff),
        in_specs=[
            pl.BlockSpec((1, tm, D), lambda b, si, fi: (b, si, 0)),     # ctx (lane-dense)
            pl.BlockSpec((1, tm, D), lambda b, si, fi: (b, si, 0)),     # x (residual)
            pl.BlockSpec((D, D), lambda b, si, fi: (0, 0)),             # out_w (full-K)
            vec(D), vec(D), vec(D),                                      # out_b, sw1 w/b
            vec(D), vec(D),                                              # ln_out w/b
            pl.BlockSpec((D, tf), lambda b, si, fi: (0, fi)),           # fc1_w (streamed)
            pl.BlockSpec((1, tf), lambda b, si, fi: (0, fi)),           # fc1_b
            pl.BlockSpec((tf, D), lambda b, si, fi: (fi, 0)),           # fc2_w (streamed)
            vec(D), vec(D), vec(D),                                      # fc2_b, sw2 w/b
        ],
        out_specs=pl.BlockSpec((1, tm, D), lambda b, si, fi: (b, si, 0)),
        scratch_shapes=[pltpu.VMEM((tm, D), jnp.float32),               # x1
                        pltpu.VMEM((tm, D), mm),                        # ln_out(x1)
                        pltpu.VMEM((tm, D), jnp.float32)],              # mlp accumulator
        compiler_params=pltpu.CompilerParams(
            dimension_semantics=("parallel", "parallel", "arbitrary"),
            vmem_limit_bytes=_vmem_limit(blk_c, vmem_cap)),
        cost_estimate=pl.CostEstimate(
            flops=int(18 * B * S * D * D),
            transcendentals=int(4 * B * S * D),
            bytes_accessed=int(B * S * D * (itm + 8)
                               + B * (S // tm) * 9 * D * D * itm + B * S * D * 4)),
    )(ctx_dense, x, out_wc, out_b, sw1_w, sw1_b, ln_out_w, ln_out_b,
      fc1_wc, fc1_b, fc2_wc, fc2_b, sw2_w, sw2_b)

    # TODO(synk): single-buffer grid-invariant weight blocks (out_w, biases) with
    # pipeline_mode=pl.Buffered(1) once verified against the installed Pallas version.
    return out


def transformer_layer_ref(x, mask, params, num_heads):
    """Pure-JAX reference matching the PyTorch forward (defaults, no cache)."""
    B, S, D = x.shape
    H = num_heads
    Dh = D // H
    d = math.sqrt(Dh)
    (ln_in_w, ln_in_b, qkv_w, qkv_b, out_w, out_b,
     sw1_w, sw1_b, ln_out_w, ln_out_b,
     fc1_w, fc1_b, fc2_w, fc2_b, sw2_w, sw2_b) = params

    ln_x = _layernorm(x, ln_in_w[0], ln_in_b[0])
    qkv = ln_x @ qkv_w + qkv_b[0]
    q, k, v = qkv[..., :D], qkv[..., D:2 * D], qkv[..., 2 * D:]
    split = lambda t: t.reshape(B, S, H, Dh).transpose(0, 2, 1, 3)
    q, k, v = split(q), split(k), split(v)
    s = jnp.einsum("bhqd,bhkd->bhqk", q / d, k)
    s = mask * s - (1.0 - mask) * 10000.0
    alpha = 32.0
    s_scaled = s / alpha
    s_max = jnp.max(s_scaled.reshape(B, H, -1), axis=-1)[:, :, None, None]
    s = (s_scaled - s_max) * alpha
    p = jax.nn.softmax(s, axis=-1)
    ctx = jnp.einsum("bhqk,bhkd->bhqd", p, v)
    ctx = ctx.transpose(0, 2, 1, 3).reshape(B, S, D)
    attn_out = ctx @ out_w + out_b[0]
    attn_out = _layernorm(attn_out, sw1_w[0], sw1_b[0])
    x1 = x + attn_out
    ln2 = _layernorm(x1, ln_out_w[0], ln_out_b[0])
    h1 = ln2 @ fc1_w + fc1_b[0]
    g = _gelu(h1)
    mlp_out = g @ fc2_w + fc2_b[0]
    mlp_out = _layernorm(mlp_out, sw2_w[0], sw2_b[0])
    return x1 + mlp_out


def make_params(key, D):
    ks = jax.random.split(key, 16)
    n = lambda k, shp, s=0.02: (s * jax.random.normal(k, shp)).astype(jnp.float32)
    ones_ish = lambda k, shp: (1.0 + 0.05 * jax.random.normal(k, shp)).astype(jnp.float32)
    return (
        ones_ish(ks[0], (1, D)),  n(ks[1], (1, D)),        # ln_in w, b
        n(ks[2], (D, 3 * D)),     n(ks[3], (1, 3 * D)),    # qkv W^T, b
        n(ks[4], (D, D)),         n(ks[5], (1, D)),        # out_proj W^T, b
        ones_ish(ks[6], (1, D)),  n(ks[7], (1, D)),        # first sandwich LN w, b
        ones_ish(ks[8], (1, D)),  n(ks[9], (1, D)),        # ln_out w, b
        n(ks[10], (D, 4 * D)),    n(ks[11], (1, 4 * D)),   # mlp lin1 W^T, b
        n(ks[12], (4 * D, D)),    n(ks[13], (1, D)),       # mlp lin2 W^T, b
        ones_ish(ks[14], (1, D)), n(ks[15], (1, D)),       # second sandwich LN w, b
    )


def _rel_l2(a, b):
    a = np.asarray(a, dtype=np.float64)
    b = np.asarray(b, dtype=np.float64)
    return float(np.linalg.norm(a - b) / np.linalg.norm(b))


if __name__ == "__main__":
    # Small, lane-friendly shapes: B=2, S=256 (1 query tile x 1 KV tile), D=128, H=4.
    B, S, D, H = 2, 256, 128, 4
    key = jax.random.PRNGKey(0)
    kx, kp = jax.random.split(key)
    x = jax.random.normal(kx, (B, S, D), dtype=jnp.float32)
    mask = jnp.tril(jnp.ones((S, S), dtype=jnp.float32))   # causal mask (1 = keep)
    params = make_params(kp, D)

    ref = transformer_layer_ref(x, mask, params, num_heads=H)

    # f32-MXU path: structural/logic verification against the reference.
    out_f32 = jax.block_until_ready(
        transformer_layer_pallas(x, mask, params, num_heads=H, matmul_dtype=jnp.float32))
    np.testing.assert_allclose(np.asarray(out_f32), np.asarray(ref), rtol=5e-2, atol=5e-2)
    assert _rel_l2(out_f32, ref) < 1e-2, "f32 path diverged from reference"

    # Default bf16-MXU fast path (f32 accumulation): relative-L2 bound vs f32 reference.
    out_bf16 = jax.block_until_ready(
        transformer_layer_pallas(x, mask, params, num_heads=H))
    assert _rel_l2(out_bf16, ref) < 5e-2, "bf16 fast path diverged from reference"

    print("KERNEL_OK")
</pallas_src>

<mosaic_0001>
module attributes {stable_mosaic.version = 11 : i64} {
  func.func @qkv_kernel(%arg0: i32, %arg1: i32, %arg2: i32, %arg3: memref<1x256x128xf32, #tpu.memory_space<vmem>>, %arg4: memref<1x128xf32, #tpu.memory_space<vmem>>, %arg5: memref<1x128xf32, #tpu.memory_space<vmem>>, %arg6: memref<128x384xf32, #tpu.memory_space<vmem>>, %arg7: memref<1x384xf32, #tpu.memory_space<vmem>>, %arg8: memref<1x256x384xf32, #tpu.memory_space<vmem>>, %arg9: memref<256x128xf32, #tpu.memory_space<vmem>>) attributes {dimension_semantics = [#tpu.dimension_semantics<parallel>, #tpu.dimension_semantics<parallel>, #tpu.dimension_semantics<arbitrary>], iteration_bounds = array<i64: 2, 1, 1>, scalar_prefetch = 0 : i64, scratch_operands = 1 : i64, tpu.core_type = #tpu.core_type<tc>, window_params = [{transform_indices = @transform_0, window_bounds = array<i64: 1, 256, 128>}, {pipeline_mode = #tpu.pipeline_mode<synchronous>, transform_indices = @transform_1, window_bounds = array<i64: 1, 128>}, {pipeline_mode = #tpu.pipeline_mode<synchronous>, transform_indices = @transform_2, window_bounds = array<i64: 1, 128>}, {transform_indices = @transform_3, window_bounds = array<i64: 128, 384>}, {transform_indices = @transform_4, window_bounds = array<i64: 1, 384>}, {transform_indices = @transform_5, window_bounds = array<i64: 1, 256, 384>}]} {
    %c0_i32 = arith.constant 0 : i32
    %0 = arith.cmpi eq, %arg2, %c0_i32 : i32
    %1 = arith.extui %0 : i1 to i32
    %c0_i32_0 = arith.constant 0 : i32
    %2 = arith.cmpi ne, %1, %c0_i32_0 : i32
    scf.if %2 {
      %c0_9 = arith.constant 0 : index
      %c0_10 = arith.constant 0 : index
      %c0_11 = arith.constant 0 : index
      %14 = vector.load %arg3[%c0_9, %c0_10, %c0_11] : memref<1x256x128xf32, #tpu.memory_space<vmem>>, vector<1x256x128xf32>
      %15 = vector.shape_cast %14 : vector<1x256x128xf32> to vector<256x128xf32>
      %c0_12 = arith.constant 0 : index
      %c0_13 = arith.constant 0 : index
      %16 = vector.load %arg4[%c0_12, %c0_13] : memref<1x128xf32, #tpu.memory_space<vmem>>, vector<1x128xf32>
      %17 = vector.shape_cast %16 : vector<1x128xf32> to vector<128xf32>
      %c0_14 = arith.constant 0 : index
      %c0_15 = arith.constant 0 : index
      %18 = vector.load %arg5[%c0_14, %c0_15] : memref<1x128xf32, #tpu.memory_space<vmem>>, vector<1x128xf32>
      %19 = vector.shape_cast %18 : vector<1x128xf32> to vector<128xf32>
      %cst_16 = arith.constant dense<0.000000e+00> : vector<256xf32>
      %20 = vector.multi_reduction <add>, %15, %cst_16 [1] : vector<256x128xf32> to vector<256xf32>
      %21 = vector.shape_cast %20 : vector<256xf32> to vector<256x1xf32>
      %cst_17 = arith.constant 1.280000e+02 : f32
      %22 = vector.broadcast %cst_17 : f32 to vector<256x1xf32>
      %23 = arith.divf %21, %22 : vector<256x1xf32>
      %24 = vector.broadcast %23 : vector<256x1xf32> to vector<256x128xf32>
      %25 = arith.subf %15, %24 : vector<256x128xf32>
      %26 = arith.mulf %25, %25 : vector<256x128xf32>
      %cst_18 = arith.constant dense<0.000000e+00> : vector<256xf32>
      %27 = vector.multi_reduction <add>, %26, %cst_18 [1] : vector<256x128xf32> to vector<256xf32>
      %28 = vector.shape_cast %27 : vector<256xf32> to vector<256x1xf32>
      %cst_19 = arith.constant 1.280000e+02 : f32
      %29 = vector.broadcast %cst_19 : f32 to vector<256x1xf32>
      %30 = arith.divf %28, %29 : vector<256x1xf32>
      %31 = vector.broadcast %23 : vector<256x1xf32> to vector<256x128xf32>
      %32 = arith.subf %15, %31 : vector<256x128xf32>
      %cst_20 = arith.constant 9.99999974E-6 : f32
      %33 = vector.broadcast %cst_20 : f32 to vector<256x1xf32>
      %34 = arith.addf %30, %33 : vector<256x1xf32>
      %35 = math.rsqrt %34 : vector<256x1xf32>
      %36 = vector.broadcast %35 : vector<256x1xf32> to vector<256x128xf32>
      %37 = arith.mulf %32, %36 : vector<256x128xf32>
      %38 = vector.shape_cast %17 : vector<128xf32> to vector<1x128xf32>
      %39 = vector.broadcast %38 : vector<1x128xf32> to vector<256x128xf32>
      %40 = arith.mulf %37, %39 : vector<256x128xf32>
      %41 = vector.shape_cast %19 : vector<128xf32> to vector<1x128xf32>
      %42 = vector.broadcast %41 : vector<1x128xf32> to vector<256x128xf32>
      %43 = arith.addf %40, %42 : vector<256x128xf32>
      %c0_21 = arith.constant 0 : index
      %c0_22 = arith.constant 0 : index
      %44 = vector.load %arg9[%c0_21, %c0_22] : memref<256x128xf32, #tpu.memory_space<vmem>>, vector<256x128xf32>
      tpu.vector_store %arg9[%c0_21, %c0_22], %43 {strides = array<i32>} : memref<256x128xf32, #tpu.memory_space<vmem>>, vector<256x128xf32>,
    } else {
    }
    %c0 = arith.constant 0 : index
    %c0_1 = arith.constant 0 : index
    %3 = vector.load %arg9[%c0, %c0_1] : memref<256x128xf32, #tpu.memory_space<vmem>>, vector<256x128xf32>
    %c0_2 = arith.constant 0 : index
    %c0_3 = arith.constant 0 : index
    %4 = vector.load %arg6[%c0_2, %c0_3] : memref<128x384xf32, #tpu.memory_space<vmem>>, vector<128x384xf32>
    %cst = arith.constant dense<0.000000e+00> : vector<256x384xf32>
    %5 = tpu.matmul %3, %4, %cst {dimension_numbers = #tpu.dot_dimension_numbers<[1], [0], [0], [1], [0, 0, 1, 1], [], []>} : vector<256x128xf32>, vector<128x384xf32>, vector<256x384xf32> -> vector<256x384xf32>
    %c0_4 = arith.constant 0 : index
    %c0_5 = arith.constant 0 : index
    %6 = vector.load %arg7[%c0_4, %c0_5] : memref<1x384xf32, #tpu.memory_space<vmem>>, vector<1x384xf32>
    %7 = vector.shape_cast %6 : vector<1x384xf32> to vector<384xf32>
    %8 = vector.shape_cast %7 : vector<384xf32> to vector<1x384xf32>
    %9 = vector.broadcast %8 : vector<1x384xf32> to vector<256x384xf32>
    %10 = arith.addf %5, %9 : vector<256x384xf32>
    %c0_6 = arith.constant 0 : index
    %c0_7 = arith.constant 0 : index
    %c0_8 = arith.constant 0 : index
    %11 = vector.load %arg8[%c0_6, %c0_7, %c0_8] : memref<1x256x384xf32, #tpu.memory_space<vmem>>, vector<1x256x384xf32>
    %12 = vector.shape_cast %11 : vector<1x256x384xf32> to vector<256x384xf32>
    %13 = vector.shape_cast %10 : vector<256x384xf32> to vector<1x256x384xf32>
    tpu.vector_store %arg8[%c0_6, %c0_7, %c0_8], %13 {strides = array<i32>} : memref<1x256x384xf32, #tpu.memory_space<vmem>>, vector<1x256x384xf32>,
    return
  }
  func.func @transform_0(%arg0: i32, %arg1: i32, %arg2: i32) -> (i32, i32, i32) {
    %c0_i32 = arith.constant 0 : i32
    %c0_i32_0 = arith.constant 0 : i32
    return %arg0, %arg1, %c0_i32 : i32, i32, i32
  }
  func.func @transform_1(%arg0: i32, %arg1: i32, %arg2: i32) -> (i32, i32) {
    %c0_i32 = arith.constant 0 : i32
    %c0_i32_0 = arith.constant 0 : i32
    %c0_i32_1 = arith.constant 0 : i32
    return %c0_i32, %c0_i32_0 : i32, i32
  }
  func.func @transform_2(%arg0: i32, %arg1: i32, %arg2: i32) -> (i32, i32) {
    %c0_i32 = arith.constant 0 : i32
    %c0_i32_0 = arith.constant 0 : i32
    %c0_i32_1 = arith.constant 0 : i32
    return %c0_i32, %c0_i32_0 : i32, i32
  }
  func.func @transform_3(%arg0: i32, %arg1: i32, %arg2: i32) -> (i32, i32) {
    %c0_i32 = arith.constant 0 : i32
    %c0_i32_0 = arith.constant 0 : i32
    return %c0_i32, %arg2 : i32, i32
  }
  func.func @transform_4(%arg0: i32, %arg1: i32, %arg2: i32) -> (i32, i32) {
    %c0_i32 = arith.constant 0 : i32
    %c0_i32_0 = arith.constant 0 : i32
    return %c0_i32, %arg2 : i32, i32
  }
  func.func @transform_5(%arg0: i32, %arg1: i32, %arg2: i32) -> (i32, i32, i32) {
    %c0_i32 = arith.constant 0 : i32
    return %arg0, %arg1, %arg2 : i32, i32, i32
  }
}

</mosaic_0001>

<llo_original>
// kernel: tpu_custom_call.1
$region0: #{tpu_custom_call.1}
  #allocation0 [shape = 'u32[]', space=smem, size = 0x4, offset = 0x4, fixed_abs, tag = 'smem constant byte address 0x4 - core index']
  #allocation1 [shape = 'u32[144,128]{1,0:T(1,128)}', space=vmem, size = 0x12000, scoped, tag = 'internal scratch']
  #allocation2 [shape = 'f32[256,128]{1,0:T(8,128)}', space=vmem, size = 0x20000, scoped, tag = 'scratch operand']
  %s0 = inlined_call_operand.hbm [shape: f32[2,256,128], index: 0, kind: input, shape index: {}]
  %s1 = inlined_call_operand.vmem [shape: f32[1,128], index: 1, kind: input, shape index: {}]
  %s2 = inlined_call_operand.vmem [shape: f32[1,128], index: 2, kind: input, shape index: {}]
  %s3 = inlined_call_operand.hbm [shape: f32[128,384], index: 3, kind: input, shape index: {}]
  %s4 = inlined_call_operand.vmem [shape: f32[1,384], index: 4, kind: input, shape index: {}]
  %s5 = inlined_call_operand.hbm [shape: f32[2,256,384], index: 5, kind: output, shape index: {}]
  %s6 = sld [smem:[#allocation0]]
  $region65: #{tpu_custom_call.1} parent=0
    _
  %s8 = ssub.s32 1, %s6
  %s9 = scalar_select 0, %s8, %s6
  $region1: #{tpu_custom_call.1} parent=0
    #allocation3 [shape = 'u8[262144]{0}', space=vmem, size = 0x40000, scoped, tag = 'input window, operand 0']
    #allocation4 [shape = 's32[2]{0}', space=sflag, size = 0x8, scoped, tag = 'scoped memory for tpu_custom_call.1']
    #allocation5 [shape = 's32[2]{0}', space=sflag, size = 0x8, scoped, tag = 'scoped memory for tpu_custom_call.1']
    #allocation6 [shape = 'u8[196608]{0}', space=vmem, size = 0x30000, scoped, tag = 'input window, operand 3, single buffered']
    #allocation7 [shape = 's32[1]{0}', space=sflag, size = 0x4, scoped, tag = 'scoped memory for tpu_custom_call.1']
    #allocation8 [shape = 'u8[786432]{0}', space=vmem, size = 0xc0000, scoped, tag = 'output window, operand 0']
    %10 = vsyncpa [#allocation4], 0
    %s11 = scalar_lea.sflag [#allocation4], 1
    %12 = vsyncpa %s11, 0
    %13 = vsyncpa [#allocation7], 0
    %14 = vsyncpa [#allocation5], 0
    %s15 = scalar_lea.sflag [#allocation5], 1
    %16 = vsyncpa %s15, 0
    loop: start=0, step=1, limit=4
    $region2: #{tpu_custom_call.1} parent=1 // loop_pre_header
      _
    $region3: #{tpu_custom_call.1} parent=1 // loop_header
      %s18 = sphi 0, %s22
      %p19 = scmp.ge.s32.totalorder %s18, 4
      %s25 = sphi 0, %s44
      %s26 = sphi 0, %s40
      %s27 = sphi 0, %s36
      %s28 = sphi 0, %s25
      %s29 = sphi 0, %s26
      %s30 = sphi 0, %s27
      %s31 = sphi 0, %s28
      %s32 = sphi 0, %s29
      %s33 = sphi 0, %s30
      %s49 = sphi 0, %s51
      %s52 = sphi 0, %s49
      %s53 = sphi 0, %s52
      %s69 = sphi 0, %s53
      %s73 = sphi 0, %s73
      %s75 = sphi 0, %s73
      %s76 = sphi 0, %s75
      %s90 = sphi 0, %s76
      %s94 = sphi 0, %s94
      %s96 = sphi 0, %s94
      %s97 = sphi 0, %s96
      %s111 = sphi 0, %s97
      %s117 = sphi 0, %s119
      %s120 = sphi 0, %s117
      %s121 = sphi 0, %s120
      %s137 = sphi 0, %s121
      %s143 = sphi 0, %s145
      %s146 = sphi 0, %s143
      %s147 = sphi 0, %s146
      %s163 = sphi 0, %s147
      %s173 = sphi 0, %s175
      %s176 = sphi 0, %s173
      %s177 = sphi 0, %s176
      %s193 = sphi 0, %s177
    $region4: #{tpu_custom_call.1} parent=1 // loop_header_branch
      %21 = sbr.rel (%p19) target = $region8
    $region5: #{tpu_custom_call.1} parent=1 // loop_body
      %s23 = ssub.s32 %s18, 1
      %s24 = ssub.s32 %s18, 2
      %s34 = sadd.s32 1, %s27
      %p35 = scmp.ge.s32.totalorder %s34, 1
      %s36 = scalar_select %p35, 0, %s34
      %s37 = sadd.s32 1, %s26
      %s38 = scalar_select %p35, %s37, %s26
      %p39 = scmp.ge.s32.totalorder %s38, 1
      %s40 = scalar_select %p39, 0, %s38
      %s41 = sadd.s32 1, %s25
      %s42 = scalar_select %p39, %s41, %s25
      %p43 = scmp.ge.s32.totalorder %s42, 2
      %s44 = scalar_select %p43, 0, %s42
      %s45 = ssub.s32 %s25, %s44
      %s46 = ssub.s32 %s26, %s40
      %s47 = sor.u32 %s45, %s46
      %p48 = scmp.eq.s32.totalorder %s47, 0
      %s50 = sadd.s32 %s49, 1
      %s51 = scalar_select %p48, %s49, %s50
      %p54 = pneg %p48
      %p55 = scmp.eq.s32.totalorder %s18, 1
      %p56 = por %p54, %p55
      %p57 = scmp.ne.s32.totalorder %s49, %s52
      %p58 = scmp.eq.s32.totalorder %s18, 0
      %p59 = por %p57, %p58
      %p60 = scmp.ne.s32.totalorder %s49, %s52
      %p61 = scmp.eq.s32.totalorder %s23, 1
      %p62 = por %p60, %p61
      %p63 = scmp.ne.s32.totalorder %s52, %s53
      %p64 = scmp.eq.s32.totalorder %s23, 0
      %p65 = por %p63, %p64
      %p66 = scmp.ne.s32.totalorder %s52, %s53
      %p67 = scmp.eq.s32.totalorder %s24, 1
      %p68 = por %p66, %p67
      %p70 = scmp.ne.s32.totalorder %s53, %s69
      %p71 = scmp.eq.s32.totalorder %s24, 0
      %p72 = por %p70, %p71
      %s74 = sadd.s32 %s73, 1
      %p77 = scmp.eq.s32.totalorder %s18, 1
      %p78 = scmp.ne.s32.totalorder %s73, %s75
      %p79 = scmp.eq.s32.totalorder %s18, 0
      %p80 = por %p78, %p79
      %p81 = scmp.ne.s32.totalorder %s73, %s75
      %p82 = scmp.eq.s32.totalorder %s23, 1
      %p83 = por %p81, %p82
      %p84 = scmp.ne.s32.totalorder %s75, %s76
      %p85 = scmp.eq.s32.totalorder %s23, 0
      %p86 = por %p84, %p85
      %p87 = scmp.ne.s32.totalorder %s75, %s76
      %p88 = scmp.eq.s32.totalorder %s24, 1
      %p89 = por %p87, %p88
      %p91 = scmp.ne.s32.totalorder %s76, %s90
      %p92 = scmp.eq.s32.totalorder %s24, 0
      %p93 = por %p91, %p92
      %s95 = sadd.s32 %s94, 1
      %p98 = scmp.eq.s32.totalorder %s18, 1
      %p99 = scmp.ne.s32.totalorder %s94, %s96
      %p100 = scmp.eq.s32.totalorder %s18, 0
      %p101 = por %p99, %p100
      %p102 = scmp.ne.s32.totalorder %s94, %s96
      %p103 = scmp.eq.s32.totalorder %s23, 1
      %p104 = por %p102, %p103
      %p105 = scmp.ne.s32.totalorder %s96, %s97
      %p106 = scmp.eq.s32.totalorder %s23, 0
      %p107 = por %p105, %p106
      %p108 = scmp.ne.s32.totalorder %s96, %s97
      %p109 = scmp.eq.s32.totalorder %s24, 1
      %p110 = por %p108, %p109
      %p112 = scmp.ne.s32.totalorder %s97, %s111
      %p113 = scmp.eq.s32.totalorder %s24, 0
      %p114 = por %p112, %p113
      %s115 = ssub.s32 %s27, %s36
      %p116 = scmp.eq.s32.totalorder %s115, 0
      %s118 = sadd.s32 %s117, 1
      %s119 = scalar_select %p116, %s117, %s118
      %p122 = pneg %p116
      %p123 = scmp.eq.s32.totalorder %s18, 1
      %p124 = por %p122, %p123
      %p125 = scmp.ne.s32.totalorder %s117, %s120
      %p126 = scmp.eq.s32.totalorder %s18, 0
      %p127 = por %p125, %p126
      %p128 = scmp.ne.s32.totalorder %s117, %s120
      %p129 = scmp.eq.s32.totalorder %s23, 1
      %p130 = por %p128, %p129
      %p131 = scmp.ne.s32.totalorder %s120, %s121
      %p132 = scmp.eq.s32.totalorder %s23, 0
      %p133 = por %p131, %p132
      %p134 = scmp.ne.s32.totalorder %s120, %s121
      %p135 = scmp.eq.s32.totalorder %s24, 1
      %p136 = por %p134, %p135
      %p138 = scmp.ne.s32.totalorder %s121, %s137
      %p139 = scmp.eq.s32.totalorder %s24, 0
      %p140 = por %p138, %p139
      %s141 = ssub.s32 %s27, %s36
      %p142 = scmp.eq.s32.totalorder %s141, 0
      %s144 = sadd.s32 %s143, 1
      %s145 = scalar_select %p142, %s143, %s144
      %p148 = pneg %p142
      %p149 = scmp.eq.s32.totalorder %s18, 1
      %p150 = por %p148, %p149
      %p151 = scmp.ne.s32.totalorder %s143, %s146
      %p152 = scmp.eq.s32.totalorder %s18, 0
      %p153 = por %p151, %p152
      %p154 = scmp.ne.s32.totalorder %s143, %s146
      %p155 = scmp.eq.s32.totalorder %s23, 1
      %p156 = por %p154, %p155
      %p157 = scmp.ne.s32.totalorder %s146, %s147
      %p158 = scmp.eq.s32.totalorder %s23, 0
      %p159 = por %p157, %p158
      %p160 = scmp.ne.s32.totalorder %s146, %s147
      %p161 = scmp.eq.s32.totalorder %s24, 1
      %p162 = por %p160, %p161
      %p164 = scmp.ne.s32.totalorder %s147, %s163
      %p165 = scmp.eq.s32.totalorder %s24, 0
      %p166 = por %p164, %p165
      %s167 = ssub.s32 %s25, %s44
      %s168 = ssub.s32 %s26, %s40
      %s169 = sor.u32 %s167, %s168
      %s170 = ssub.s32 %s27, %s36
      %s171 = sor.u32 %s169, %s170
      %p172 = scmp.eq.s32.totalorder %s171, 0
      %s174 = sadd.s32 %s173, 1
      %s175 = scalar_select %p172, %s173, %s174
      %p178 = pneg %p172
      %p179 = scmp.eq.s32.totalorder %s18, 1
      %p180 = por %p178, %p179
      %p181 = scmp.ne.s32.totalorder %s173, %s176
      %p182 = scmp.eq.s32.totalorder %s18, 0
      %p183 = por %p181, %p182
      %p184 = scmp.ne.s32.totalorder %s173, %s176
      %p185 = scmp.eq.s32.totalorder %s23, 1
      %p186 = por %p184, %p185
      %p187 = scmp.ne.s32.totalorder %s176, %s177
      %p188 = scmp.eq.s32.totalorder %s23, 0
      %p189 = por %p187, %p188
      %p190 = scmp.ne.s32.totalorder %s176, %s177
      %p191 = scmp.eq.s32.totalorder %s24, 1
      %p192 = por %p190, %p191
      %p194 = scmp.ne.s32.totalorder %s177, %s193
      %p195 = scmp.eq.s32.totalorder %s24, 0
      %p196 = por %p194, %p195
      %p197 = scmp.le.s32.totalorder 1, %s18
      %p198 = scmp.lt.s32.totalorder %s18, 3
      %p199 = pnand %p197, %p198
      %p200 = pneg %p199
      // Predicated region
      $region9: #{tpu_custom_call.1} parent=5 // pred_check
        _
      $region10: #{tpu_custom_call.1} parent=5 // pred_check_branch
        %202 = sbr.rel (%p199) target = $region12
      $region11: #{tpu_custom_call.1} parent=5 // pred_region
        %s203 = ssub.s32 %s18, 1
        // Predicated region
        $region13: #{tpu_custom_call.1} parent=11 // pred_check
          %p204 = pneg %p86
        $region14: #{tpu_custom_call.1} parent=11 // pred_check_branch
          %206 = sbr.rel (%p204) target = $region16
        $region15: #{tpu_custom_call.1} parent=11 // pred_region
          _
        $region16: #{tpu_custom_call.1} parent=11 // pred_fallthru
          _
        // Predicated region
        $region17: #{tpu_custom_call.1} parent=11 // pred_check
          %p207 = pneg %p107
        $region18: #{tpu_custom_call.1} parent=11 // pred_check_branch
          %209 = sbr.rel (%p207) target = $region20
        $region19: #{tpu_custom_call.1} parent=11 // pred_region
          _
        $region20: #{tpu_custom_call.1} parent=11 // pred_fallthru
          _
        // Predicated region
        $region21: #{tpu_custom_call.1} parent=11 // pred_check
          %p210 = pneg %p133
        $region22: #{tpu_custom_call.1} parent=11 // pred_check_branch
          %212 = sbr.rel (%p210) target = $region24
        $region23: #{tpu_custom_call.1} parent=11 // pred_region
          %s213 = smul.u32 3, %s30
          %s215 = ssub.s32 6144, 6144
          %216 = vsyncadd [#allocation7], %s215
          %s217 = smul.addr %s213, 128
          %s218 = scalar_lea.hbm %s3, %s217
          %s219 = sshll.u32 [#allocation6], 4
          %s220 = int_to_ptr.vmem [resolvable:$true] %s219
          %225 = dma.hbm_to_vmem [thread:$0]  %s218, 6144, %s220, [#allocation7], 384, 384, 24
        $region24: #{tpu_custom_call.1} parent=11 // pred_fallthru
          _
        // Predicated region
        $region25: #{tpu_custom_call.1} parent=11 // pred_check
          %p226 = pneg %p159
        $region26: #{tpu_custom_call.1} parent=11 // pred_check_branch
          %228 = sbr.rel (%p226) target = $region28
        $region27: #{tpu_custom_call.1} parent=11 // pred_region
          %s229 = smul.u32 3, %s30
          %p230 = scmp.lt.s32.totalorder %s229, 2
          %s231 = scalar_select %p230, %s229, 2
          %s232 = scalar_lea.vmem %s4, %s231
          %s233 = smul.u32 3, %s30
        $region28: #{tpu_custom_call.1} parent=11 // pred_fallthru
          _
      $region12: #{tpu_custom_call.1} parent=5 // pred_fallthru
        _
      %p234 = scmp.lt.s32.totalorder %s18, 2
      // Predicated region
      $region29: #{tpu_custom_call.1} parent=5 // pred_check
        %p235 = pneg %p234
      $region30: #{tpu_custom_call.1} parent=5 // pred_check_branch
        %237 = sbr.rel (%p235) target = $region32
      $region31: #{tpu_custom_call.1} parent=5 // pred_region
        // Predicated region
        $region33: #{tpu_custom_call.1} parent=31 // pred_check
          %p238 = pneg %p59
        $region34: #{tpu_custom_call.1} parent=31 // pred_check_branch
          %240 = sbr.rel (%p238) target = $region36
        $region35: #{tpu_custom_call.1} parent=31 // pred_region
          %s241 = sand.u32 %s49, 1
          %s242 = scalar_lea.sflag [#allocation4], %s241
          %s243 = sand.u32 %s49, 1
          %s244 = smul.addr %s243, 256
          %s245 = scalar_lea.vmem [#allocation3], %s244
          %s246 = smul.u32 32, %s26
          %s248 = ssub.s32 4096, 4096
          %249 = vsyncadd %s242, %s248
          %s250 = smul.addr %s25, 32
          %s251 = sadd.s32 %s246, %s250
          %s252 = smul.addr %s251, 128
          %s253 = scalar_lea.hbm %s0, %s252
          %s254 = sshll.u32 %s245, 4
          %s255 = int_to_ptr.vmem [resolvable:$true] %s254
          %260 = dma.hbm_to_vmem [thread:$0]  %s253, 4096, %s255, %s242, 128, 128, 8
        $region36: #{tpu_custom_call.1} parent=31 // pred_fallthru
          _
      $region32: #{tpu_custom_call.1} parent=5 // pred_fallthru
        _
      %p261 = scmp.le.s32.totalorder 1, %s18
      %p262 = scmp.lt.s32.totalorder %s18, 3
      %p263 = pnand %p261, %p262
      %p264 = pneg %p263
      // Predicated region
      $region37: #{tpu_custom_call.1} parent=5 // pred_check
        _
      $region38: #{tpu_custom_call.1} parent=5 // pred_check_branch
        %266 = sbr.rel (%p263) target = $region40
      $region39: #{tpu_custom_call.1} parent=5 // pred_region
        %s267 = ssub.s32 %s18, 1
        %s268 = sand.u32 %s52, 1
        %s269 = scalar_lea.sflag [#allocation4], %s268
        %s270 = sand.u32 %s52, 1
        %s271 = smul.addr %s270, 256
        %s272 = scalar_lea.vmem [#allocation3], %s271
        // Predicated region
        $region41: #{tpu_custom_call.1} parent=39 // pred_check
          %p273 = pneg %p65
        $region42: #{tpu_custom_call.1} parent=39 // pred_check_branch
          %275 = sbr.rel (%p273) target = $region44
        $region43: #{tpu_custom_call.1} parent=39 // pred_region
          %276 = dma.done %s269, 4096
        $region44: #{tpu_custom_call.1} parent=39 // pred_fallthru
          _
        // Predicated region
        $region45: #{tpu_custom_call.1} parent=39 // pred_check
          %p277 = pneg %p133
        $region46: #{tpu_custom_call.1} parent=39 // pred_check_branch
          %279 = sbr.rel (%p277) target = $region48
        $region47: #{tpu_custom_call.1} parent=39 // pred_region
          %280 = dma.done [#allocation7], 6144
        $region48: #{tpu_custom_call.1} parent=39 // pred_fallthru
          _
        %s281 = sand.u32 %s52, 1
        %s282 = scalar_lea.sflag [#allocation4], %s281
        %s283 = sand.u32 %s52, 1
        %s284 = smul.addr %s283, 256
        %s285 = scalar_lea.vmem [#allocation3], %s284
        %p286 = pneg %p65
        %p287 = pneg %p62
        %p288 = pneg %p86
        %p289 = pneg %p83
        %p290 = pneg %p107
        %p291 = pneg %p104
        %p292 = pneg %p133
        %p293 = pneg %p130
        %s294 = smul.u32 3, %s30
        %p295 = scmp.lt.s32.totalorder %s294, 2
        %s296 = scalar_select %p295, %s294, 2
        %s297 = scalar_lea.vmem %s4, %s296
        %p298 = pneg %p159
        %p299 = pneg %p156
        %p300 = pneg %p189
        %p301 = pneg %p186
        %s302 = sand.u32 %s176, 1
        %s303 = scalar_lea.sflag [#allocation5], %s302
        %s304 = sand.u32 %s176, 1
        %s305 = smul.addr %s304, 768
        %s306 = scalar_lea.vmem [#allocation8], %s305
        %s307 = smul.u32 32, %s29
        %s308 = smul.u32 3, %s30
        %s309 = smul.u32 3, %s30
        %p310 = scmp.lt.s32.totalorder %s309, 2
        %s311 = scalar_select %p310, %s309, 2
        %s312 = scalar_lea.vmem %s4, %s311
        %s313 = smul.u32 3, %s30
        %s314 = smul.u32 32, %s29
        %s315 = smul.u32 3, %s30
        %p316 = scmp.eq.s32.totalorder %s30, 0
        // Predicated region
        $region49: #{tpu_custom_call.1} parent=39 // pred_check
          %p317 = pneg %p316
        $region50: #{tpu_custom_call.1} parent=39 // pred_check_branch
          %319 = sbr.rel (%p317) target = $region52
        $region51: #{tpu_custom_call.1} parent=39 // pred_region
          %v320 = vld [vmem:[%s272] sm:$0xff]
          %v321 = vld [vmem:[%s272 + $0x8] sm:$0xff]
          %v322 = vld [vmem:[%s272 + $0x10] sm:$0xff]
          %v323 = vld [vmem:[%s272 + $0x18] sm:$0xff]
          %v324 = vld [vmem:[%s272 + $0x20] sm:$0xff]
          %v325 = vld [vmem:[%s272 + $0x28] sm:$0xff]
          %v326 = vld [vmem:[%s272 + $0x30] sm:$0xff]
          %v327 = vld [vmem:[%s272 + $0x38] sm:$0xff]
          %v328 = vld [vmem:[%s272 + $0x40] sm:$0xff]
          %v329 = vld [vmem:[%s272 + $0x48] sm:$0xff]
          %v330 = vld [vmem:[%s272 + $0x50] sm:$0xff]
          %v331 = vld [vmem:[%s272 + $0x58] sm:$0xff]
          %v332 = vld [vmem:[%s272 + $0x60] sm:$0xff]
          %v333 = vld [vmem:[%s272 + $0x68] sm:$0xff]
          %v334 = vld [vmem:[%s272 + $0x70] sm:$0xff]
          %v335 = vld [vmem:[%s272 + $0x78] sm:$0xff]
          %v336 = vld [vmem:[%s272 + $0x80] sm:$0xff]
          %v337 = vld [vmem:[%s272 + $0x88] sm:$0xff]
          %v338 = vld [vmem:[%s272 + $0x90] sm:$0xff]
          %v339 = vld [vmem:[%s272 + $0x98] sm:$0xff]
          %v340 = vld [vmem:[%s272 + $0xa0] sm:$0xff]
          %v341 = vld [vmem:[%s272 + $0xa8] sm:$0xff]
          %v342 = vld [vmem:[%s272 + $0xb0] sm:$0xff]
          %v343 = vld [vmem:[%s272 + $0xb8] sm:$0xff]
          %v344 = vld [vmem:[%s272 + $0xc0] sm:$0xff]
          %v345 = vld [vmem:[%s272 + $0xc8] sm:$0xff]
          %v346 = vld [vmem:[%s272 + $0xd0] sm:$0xff]
          %v347 = vld [vmem:[%s272 + $0xd8] sm:$0xff]
          %v348 = vld [vmem:[%s272 + $0xe0] sm:$0xff]
          %v349 = vld [vmem:[%s272 + $0xe8] sm:$0xff]
          %v350 = vld [vmem:[%s272 + $0xf0] sm:$0xff]
          %v351 = vld [vmem:[%s272 + $0xf8] sm:$0xff]
          %v352 = vld [vmem:[%s1] sm:$0x1]
          %v353 = vld [vmem:[%s2] sm:$0x1]
          %354 = vadd.xlane.f32.xlu0 %v320
          %v355 = vpop.xlane.xlu0 %354
          %356 = vadd.xlane.f32.xlu0 %v321
          %v357 = vpop.xlane.xlu0 %356
          %358 = vadd.xlane.f32.xlu0 %v322
          %v359 = vpop.xlane.xlu0 %358
          %360 = vadd.xlane.f32.xlu0 %v323
          %v361 = vpop.xlane.xlu0 %360
          %362 = vadd.xlane.f32.xlu0 %v324
          %v363 = vpop.xlane.xlu0 %362
          %364 = vadd.xlane.f32.xlu0 %v325
          %v365 = vpop.xlane.xlu0 %364
          %366 = vadd.xlane.f32.xlu0 %v326
          %v367 = vpop.xlane.xlu0 %366
          %368 = vadd.xlane.f32.xlu0 %v327
          %v369 = vpop.xlane.xlu0 %368
          %370 = vadd.xlane.f32.xlu0 %v328
          %v371 = vpop.xlane.xlu0 %370
          %372 = vadd.xlane.f32.xlu0 %v329
          %v373 = vpop.xlane.xlu0 %372
          %374 = vadd.xlane.f32.xlu0 %v330
          %v375 = vpop.xlane.xlu0 %374
          %376 = vadd.xlane.f32.xlu0 %v331
          %v377 = vpop.xlane.xlu0 %376
          %378 = vadd.xlane.f32.xlu0 %v332
          %v379 = vpop.xlane.xlu0 %378
          %380 = vadd.xlane.f32.xlu0 %v333
          %v381 = vpop.xlane.xlu0 %380
          %382 = vadd.xlane.f32.xlu0 %v334
          %v383 = vpop.xlane.xlu0 %382
          %384 = vadd.xlane.f32.xlu0 %v335
          %v385 = vpop.xlane.xlu0 %384
          %386 = vadd.xlane.f32.xlu0 %v336
          %v387 = vpop.xlane.xlu0 %386
          %388 = vadd.xlane.f32.xlu0 %v337
          %v389 = vpop.xlane.xlu0 %388
          %390 = vadd.xlane.f32.xlu0 %v338
          %v391 = vpop.xlane.xlu0 %390
          %392 = vadd.xlane.f32.xlu0 %v339
          %v393 = vpop.xlane.xlu0 %392
          %394 = vadd.xlane.f32.xlu0 %v340
          %v395 = vpop.xlane.xlu0 %394
          %396 = vadd.xlane.f32.xlu0 %v341
          %v397 = vpop.xlane.xlu0 %396
          %398 = vadd.xlane.f32.xlu0 %v342
          %v399 = vpop.xlane.xlu0 %398
          %400 = vadd.xlane.f32.xlu0 %v343
          %v401 = vpop.xlane.xlu0 %400
          %402 = vadd.xlane.f32.xlu0 %v344
          %v403 = vpop.xlane.xlu0 %402
          %404 = vadd.xlane.f32.xlu0 %v345
          %v405 = vpop.xlane.xlu0 %404
          %406 = vadd.xlane.f32.xlu0 %v346
          %v407 = vpop.xlane.xlu0 %406
          %408 = vadd.xlane.f32.xlu0 %v347
          %v409 = vpop.xlane.xlu0 %408
          %410 = vadd.xlane.f32.xlu0 %v348
          %v411 = vpop.xlane.xlu0 %410
          %412 = vadd.xlane.f32.xlu0 %v349
          %v413 = vpop.xlane.xlu0 %412
          %414 = vadd.xlane.f32.xlu0 %v350
          %v415 = vpop.xlane.xlu0 %414
          %416 = vadd.xlane.f32.xlu0 %v351
          %v417 = vpop.xlane.xlu0 %416
          %v418 = vrcp.pop 128.0
          %v419 = vmul.f32 %v355, %v418
          %v420 = vmul.f32 %v357, %v418
          %v421 = vmul.f32 %v359, %v418
          %v422 = vmul.f32 %v361, %v418
          %v423 = vmul.f32 %v363, %v418
          %v424 = vmul.f32 %v365, %v418
          %v425 = vmul.f32 %v367, %v418
          %v426 = vmul.f32 %v369, %v418
          %v427 = vmul.f32 %v371, %v418
          %v428 = vmul.f32 %v373, %v418
          %v429 = vmul.f32 %v375, %v418
          %v430 = vmul.f32 %v377, %v418
          %v431 = vmul.f32 %v379, %v418
          %v432 = vmul.f32 %v381, %v418
          %v433 = vmul.f32 %v383, %v418
          %v434 = vmul.f32 %v385, %v418
          %v435 = vmul.f32 %v387, %v418
          %v436 = vmul.f32 %v389, %v418
          %v437 = vmul.f32 %v391, %v418
          %v438 = vmul.f32 %v393, %v418
          %v439 = vmul.f32 %v395, %v418
          %v440 = vmul.f32 %v397, %v418
          %v441 = vmul.f32 %v399, %v418
          %v442 = vmul.f32 %v401, %v418
          %v443 = vmul.f32 %v403, %v418
          %v444 = vmul.f32 %v405, %v418
          %v445 = vmul.f32 %v407, %v418
          %v446 = vmul.f32 %v409, %v418
          %v447 = vmul.f32 %v411, %v418
          %v448 = vmul.f32 %v413, %v418
          %v449 = vmul.f32 %v415, %v418
          %v450 = vmul.f32 %v417, %v418
          %v451 = vsub.f32 %v320, %v419
          %v452 = vsub.f32 %v321, %v420
          %v453 = vsub.f32 %v322, %v421
          %v454 = vsub.f32 %v323, %v422
          %v455 = vsub.f32 %v324, %v423
          %v456 = vsub.f32 %v325, %v424
          %v457 = vsub.f32 %v326, %v425
          %v458 = vsub.f32 %v327, %v426
          %v459 = vsub.f32 %v328, %v427
          %v460 = vsub.f32 %v329, %v428
          %v461 = vsub.f32 %v330, %v429
          %v462 = vsub.f32 %v331, %v430
          %v463 = vsub.f32 %v332, %v431
          %v464 = vsub.f32 %v333, %v432
          %v465 = vsub.f32 %v334, %v433
          %v466 = vsub.f32 %v335, %v434
          %v467 = vsub.f32 %v336, %v435
          %v468 = vsub.f32 %v337, %v436
          %v469 = vsub.f32 %v338, %v437
          %v470 = vsub.f32 %v339, %v438
          %v471 = vsub.f32 %v340, %v439
          %v472 = vsub.f32 %v341, %v440
          %v473 = vsub.f32 %v342, %v441
          %v474 = vsub.f32 %v343, %v442
          %v475 = vsub.f32 %v344, %v443
          %v476 = vsub.f32 %v345, %v444
          %v477 = vsub.f32 %v346, %v445
          %v478 = vsub.f32 %v347, %v446
          %v479 = vsub.f32 %v348, %v447
          %v480 = vsub.f32 %v349, %v448
          %v481 = vsub.f32 %v350, %v449
          %v482 = vsub.f32 %v351, %v450
          %v483 = vmul.f32 %v451, %v451
          %v484 = vmul.f32 %v452, %v452
          %v485 = vmul.f32 %v453, %v453
          %v486 = vmul.f32 %v454, %v454
          %v487 = vmul.f32 %v455, %v455
          %v488 = vmul.f32 %v456, %v456
          %v489 = vmul.f32 %v457, %v457
          %v490 = vmul.f32 %v458, %v458
          %v491 = vmul.f32 %v459, %v459
          %v492 = vmul.f32 %v460, %v460
          %v493 = vmul.f32 %v461, %v461
          %v494 = vmul.f32 %v462, %v462
          %v495 = vmul.f32 %v463, %v463
          %v496 = vmul.f32 %v464, %v464
          %v497 = vmul.f32 %v465, %v465
          %v498 = vmul.f32 %v466, %v466
          %v499 = vmul.f32 %v467, %v467
          %v500 = vmul.f32 %v468, %v468
          %v501 = vmul.f32 %v469, %v469
          %v502 = vmul.f32 %v470, %v470
          %v503 = vmul.f32 %v471, %v471
          %v504 = vmul.f32 %v472, %v472
          %v505 = vmul.f32 %v473, %v473
          %v506 = vmul.f32 %v474, %v474
          %v507 = vmul.f32 %v475, %v475
          %v508 = vmul.f32 %v476, %v476
          %v509 = vmul.f32 %v477, %v477
          %v510 = vmul.f32 %v478, %v478
          %v511 = vmul.f32 %v479, %v479
          %v512 = vmul.f32 %v480, %v480
          %v513 = vmul.f32 %v481, %v481
          %v514 = vmul.f32 %v482, %v482
          %515 = vadd.xlane.f32.xlu0 %v483
          %v516 = vpop.xlane.xlu0 %515
          %517 = vadd.xlane.f32.xlu0 %v484
          %v518 = vpop.xlane.xlu0 %517
          %519 = vadd.xlane.f32.xlu0 %v485
          %v520 = vpop.xlane.xlu0 %519
          %521 = vadd.xlane.f32.xlu0 %v486
          %v522 = vpop.xlane.xlu0 %521
          %523 = vadd.xlane.f32.xlu0 %v487
          %v524 = vpop.xlane.xlu0 %523
          %525 = vadd.xlane.f32.xlu0 %v488
          %v526 = vpop.xlane.xlu0 %525
          %527 = vadd.xlane.f32.xlu0 %v489
          %v528 = vpop.xlane.xlu0 %527
          %529 = vadd.xlane.f32.xlu0 %v490
          %v530 = vpop.xlane.xlu0 %529
          %531 = vadd.xlane.f32.xlu0 %v491
          %v532 = vpop.xlane.xlu0 %531
          %533 = vadd.xlane.f32.xlu0 %v492
          %v534 = vpop.xlane.xlu0 %533
          %535 = vadd.xlane.f32.xlu0 %v493
          %v536 = vpop.xlane.xlu0 %535
          %537 = vadd.xlane.f32.xlu0 %v494
          %v538 = vpop.xlane.xlu0 %537
          %539 = vadd.xlane.f32.xlu0 %v495
          %v540 = vpop.xlane.xlu0 %539
          %541 = vadd.xlane.f32.xlu0 %v496
          %v542 = vpop.xlane.xlu0 %541
          %543 = vadd.xlane.f32.xlu0 %v497
          %v544 = vpop.xlane.xlu0 %543
          %545 = vadd.xlane.f32.xlu0 %v498
          %v546 = vpop.xlane.xlu0 %545
          %547 = vadd.xlane.f32.xlu0 %v499
          %v548 = vpop.xlane.xlu0 %547
          %549 = vadd.xlane.f32.xlu0 %v500
          %v550 = vpop.xlane.xlu0 %549
          %551 = vadd.xlane.f32.xlu0 %v501
          %v552 = vpop.xlane.xlu0 %551
          %553 = vadd.xlane.f32.xlu0 %v502
          %v554 = vpop.xlane.xlu0 %553
          %555 = vadd.xlane.f32.xlu0 %v503
          %v556 = vpop.xlane.xlu0 %555
          %557 = vadd.xlane.f32.xlu0 %v504
          %v558 = vpop.xlane.xlu0 %557
          %559 = vadd.xlane.f32.xlu0 %v505
          %v560 = vpop.xlane.xlu0 %559
          %561 = vadd.xlane.f32.xlu0 %v506
          %v562 = vpop.xlane.xlu0 %561
          %563 = vadd.xlane.f32.xlu0 %v507
          %v564 = vpop.xlane.xlu0 %563
          %565 = vadd.xlane.f32.xlu0 %v508
          %v566 = vpop.xlane.xlu0 %565
          %567 = vadd.xlane.f32.xlu0 %v509
          %v568 = vpop.xlane.xlu0 %567
          %569 = vadd.xlane.f32.xlu0 %v510
          %v570 = vpop.xlane.xlu0 %569
          %571 = vadd.xlane.f32.xlu0 %v511
          %v572 = vpop.xlane.xlu0 %571
          %573 = vadd.xlane.f32.xlu0 %v512
          %v574 = vpop.xlane.xlu0 %573
          %575 = vadd.xlane.f32.xlu0 %v513
          %v576 = vpop.xlane.xlu0 %575
          %577 = vadd.xlane.f32.xlu0 %v514
          %v578 = vpop.xlane.xlu0 %577
          %v579 = vmul.f32 %v516, %v418
          %v580 = vmul.f32 %v518, %v418
          %v581 = vmul.f32 %v520, %v418
          %v582 = vmul.f32 %v522, %v418
          %v583 = vmul.f32 %v524, %v418
          %v584 = vmul.f32 %v526, %v418
          %v585 = vmul.f32 %v528, %v418
          %v586 = vmul.f32 %v530, %v418
          %v587 = vmul.f32 %v532, %v418
          %v588 = vmul.f32 %v534, %v418
          %v589 = vmul.f32 %v536, %v418
          %v590 = vmul.f32 %v538, %v418
          %v591 = vmul.f32 %v540, %v418
          %v592 = vmul.f32 %v542, %v418
          %v593 = vmul.f32 %v544, %v418
          %v594 = vmul.f32 %v546, %v418
          %v595 = vmul.f32 %v548, %v418
          %v596 = vmul.f32 %v550, %v418
          %v597 = vmul.f32 %v552, %v418
          %v598 = vmul.f32 %v554, %v418
          %v599 = vmul.f32 %v556, %v418
          %v600 = vmul.f32 %v558, %v418
          %v601 = vmul.f32 %v560, %v418
          %v602 = vmul.f32 %v562, %v418
          %v603 = vmul.f32 %v564, %v418
          %v604 = vmul.f32 %v566, %v418
          %v605 = vmul.f32 %v568, %v418
          %v606 = vmul.f32 %v570, %v418
          %v607 = vmul.f32 %v572, %v418
          %v608 = vmul.f32 %v574, %v418
          %v609 = vmul.f32 %v576, %v418
          %v610 = vmul.f32 %v578, %v418
          %v611 = vadd.f32 %v579, 1e-05
          %v612 = vadd.f32 %v580, 1e-05
          %v613 = vadd.f32 %v581, 1e-05
          %v614 = vadd.f32 %v582, 1e-05
          %v615 = vadd.f32 %v583, 1e-05
          %v616 = vadd.f32 %v584, 1e-05
          %v617 = vadd.f32 %v585, 1e-05
          %v618 = vadd.f32 %v586, 1e-05
          %v619 = vadd.f32 %v587, 1e-05
          %v620 = vadd.f32 %v588, 1e-05
          %v621 = vadd.f32 %v589, 1e-05
          %v622 = vadd.f32 %v590, 1e-05
          %v623 = vadd.f32 %v591, 1e-05
          %v624 = vadd.f32 %v592, 1e-05
          %v625 = vadd.f32 %v593, 1e-05
          %v626 = vadd.f32 %v594, 1e-05
          %v627 = vadd.f32 %v595, 1e-05
          %v628 = vadd.f32 %v596, 1e-05
          %v629 = vadd.f32 %v597, 1e-05
          %v630 = vadd.f32 %v598, 1e-05
          %v631 = vadd.f32 %v599, 1e-05
          %v632 = vadd.f32 %v600, 1e-05
          %v633 = vadd.f32 %v601, 1e-05
          %v634 = vadd.f32 %v602, 1e-05
          %v635 = vadd.f32 %v603, 1e-05
          %v636 = vadd.f32 %v604, 1e-05
          %v637 = vadd.f32 %v605, 1e-05
          %v638 = vadd.f32 %v606, 1e-05
          %v639 = vadd.f32 %v607, 1e-05
          %v640 = vadd.f32 %v608, 1e-05
          %v641 = vadd.f32 %v609, 1e-05
          %v642 = vadd.f32 %v610, 1e-05
          %v643 = vrsqrt.pop %v611
          %v644 = vrsqrt.pop %v612
          %v645 = vrsqrt.pop %v613
          %v646 = vrsqrt.pop %v614
          %v647 = vrsqrt.pop %v615
          %v648 = vrsqrt.pop %v616
          %v649 = vrsqrt.pop %v617
          %v650 = vrsqrt.pop %v618
          %v651 = vrsqrt.pop %v619
          %v652 = vrsqrt.pop %v620
          %v653 = vrsqrt.pop %v621
          %v654 = vrsqrt.pop %v622
          %v655 = vrsqrt.pop %v623
          %v656 = vrsqrt.pop %v624
          %v657 = vrsqrt.pop %v625
          %v658 = vrsqrt.pop %v626
          %v659 = vrsqrt.pop %v627
          %v660 = vrsqrt.pop %v628
          %v661 = vrsqrt.pop %v629
          %v662 = vrsqrt.pop %v630
          %v663 = vrsqrt.pop %v631
          %v664 = vrsqrt.pop %v632
          %v665 = vrsqrt.pop %v633
          %v666 = vrsqrt.pop %v634
          %v667 = vrsqrt.pop %v635
          %v668 = vrsqrt.pop %v636
          %v669 = vrsqrt.pop %v637
          %v670 = vrsqrt.pop %v638
          %v671 = vrsqrt.pop %v639
          %v672 = vrsqrt.pop %v640
          %v673 = vrsqrt.pop %v641
          %v674 = vrsqrt.pop %v642
          %v675 = vmul.f32 %v451, %v643
          %v676 = vmul.f32 %v452, %v644
          %v677 = vmul.f32 %v453, %v645
          %v678 = vmul.f32 %v454, %v646
          %v679 = vmul.f32 %v455, %v647
          %v680 = vmul.f32 %v456, %v648
          %v681 = vmul.f32 %v457, %v649
          %v682 = vmul.f32 %v458, %v650
          %v683 = vmul.f32 %v459, %v651
          %v684 = vmul.f32 %v460, %v652
          %v685 = vmul.f32 %v461, %v653
          %v686 = vmul.f32 %v462, %v654
          %v687 = vmul.f32 %v463, %v655
          %v688 = vmul.f32 %v464, %v656
          %v689 = vmul.f32 %v465, %v657
          %v690 = vmul.f32 %v466, %v658
          %v691 = vmul.f32 %v467, %v659
          %v692 = vmul.f32 %v468, %v660
          %v693 = vmul.f32 %v469, %v661
          %v694 = vmul.f32 %v470, %v662
          %v695 = vmul.f32 %v471, %v663
          %v696 = vmul.f32 %v472, %v664
          %v697 = vmul.f32 %v473, %v665
          %v698 = vmul.f32 %v474, %v666
          %v699 = vmul.f32 %v475, %v667
          %v700 = vmul.f32 %v476, %v668
          %v701 = vmul.f32 %v477, %v669
          %v702 = vmul.f32 %v478, %v670
          %v703 = vmul.f32 %v479, %v671
          %v704 = vmul.f32 %v480, %v672
          %v705 = vmul.f32 %v481, %v673
          %v706 = vmul.f32 %v482, %v674
          %v708 = vlaneseq
          %v709 = vshrl.u32 %v708, 7
          %v710 = vsub.s32 0, %v709
          %v711 = vrot.slane %v352, %v710
          %v713 = vmul.f32 %v675, %v711
          %v714 = vmul.f32 %v676, %v711
          %v715 = vmul.f32 %v677, %v711
          %v716 = vmul.f32 %v678, %v711
          %v717 = vmul.f32 %v679, %v711
          %v718 = vmul.f32 %v680, %v711
          %v719 = vmul.f32 %v681, %v711
          %v720 = vmul.f32 %v682, %v711
          %v721 = vmul.f32 %v683, %v711
          %v722 = vmul.f32 %v684, %v711
          %v723 = vmul.f32 %v685, %v711
          %v724 = vmul.f32 %v686, %v711
          %v725 = vmul.f32 %v687, %v711
          %v726 = vmul.f32 %v688, %v711
          %v727 = vmul.f32 %v689, %v711
          %v728 = vmul.f32 %v690, %v711
          %v729 = vmul.f32 %v691, %v711
          %v730 = vmul.f32 %v692, %v711
          %v731 = vmul.f32 %v693, %v711
          %v732 = vmul.f32 %v694, %v711
          %v733 = vmul.f32 %v695, %v711
          %v734 = vmul.f32 %v696, %v711
          %v735 = vmul.f32 %v697, %v711
          %v736 = vmul.f32 %v698, %v711
          %v737 = vmul.f32 %v699, %v711
          %v738 = vmul.f32 %v700, %v711
          %v739 = vmul.f32 %v701, %v711
          %v740 = vmul.f32 %v702, %v711
          %v741 = vmul.f32 %v703, %v711
          %v742 = vmul.f32 %v704, %v711
          %v743 = vmul.f32 %v705, %v711
          %v744 = vmul.f32 %v706, %v711
          %v746 = vlaneseq
          %v747 = vshrl.u32 %v746, 7
          %v748 = vsub.s32 0, %v747
          %v749 = vrot.slane %v353, %v748
          %v751 = vadd.f32 %v713, %v749
          %v752 = vadd.f32 %v714, %v749
          %v753 = vadd.f32 %v715, %v749
          %v754 = vadd.f32 %v716, %v749
          %v755 = vadd.f32 %v717, %v749
          %v756 = vadd.f32 %v718, %v749
          %v757 = vadd.f32 %v719, %v749
          %v758 = vadd.f32 %v720, %v749
          %v759 = vadd.f32 %v721, %v749
          %v760 = vadd.f32 %v722, %v749
          %v761 = vadd.f32 %v723, %v749
          %v762 = vadd.f32 %v724, %v749
          %v763 = vadd.f32 %v725, %v749
          %v764 = vadd.f32 %v726, %v749
          %v765 = vadd.f32 %v727, %v749
          %v766 = vadd.f32 %v728, %v749
          %v767 = vadd.f32 %v729, %v749
          %v768 = vadd.f32 %v730, %v749
          %v769 = vadd.f32 %v731, %v749
          %v770 = vadd.f32 %v732, %v749
          %v771 = vadd.f32 %v733, %v749
          %v772 = vadd.f32 %v734, %v749
          %v773 = vadd.f32 %v735, %v749
          %v774 = vadd.f32 %v736, %v749
          %v775 = vadd.f32 %v737, %v749
          %v776 = vadd.f32 %v738, %v749
          %v777 = vadd.f32 %v739, %v749
          %v778 = vadd.f32 %v740, %v749
          %v779 = vadd.f32 %v741, %v749
          %v780 = vadd.f32 %v742, %v749
          %v781 = vadd.f32 %v743, %v749
          %v782 = vadd.f32 %v744, %v749
          %783 = vst [vmem:[#allocation2] sm:$0xff] %v751
          %784 = vst [vmem:[#allocation2 + $0x8] sm:$0xff] %v752
          %785 = vst [vmem:[#allocation2 + $0x10] sm:$0xff] %v753
          %786 = vst [vmem:[#allocation2 + $0x18] sm:$0xff] %v754
          %787 = vst [vmem:[#allocation2 + $0x20] sm:$0xff] %v755
          %788 = vst [vmem:[#allocation2 + $0x28] sm:$0xff] %v756
          %789 = vst [vmem:[#allocation2 + $0x30] sm:$0xff] %v757
          %790 = vst [vmem:[#allocation2 + $0x38] sm:$0xff] %v758
          %791 = vst [vmem:[#allocation2 + $0x40] sm:$0xff] %v759
          %792 = vst [vmem:[#allocation2 + $0x48] sm:$0xff] %v760
          %793 = vst [vmem:[#allocation2 + $0x50] sm:$0xff] %v761
          %794 = vst [vmem:[#allocation2 + $0x58] sm:$0xff] %v762
          %795 = vst [vmem:[#allocation2 + $0x60] sm:$0xff] %v763
          %796 = vst [vmem:[#allocation2 + $0x68] sm:$0xff] %v764
          %797 = vst [vmem:[#allocation2 + $0x70] sm:$0xff] %v765
          %798 = vst [vmem:[#allocation2 + $0x78] sm:$0xff] %v766
          %799 = vst [vmem:[#allocation2 + $0x80] sm:$0xff] %v767
          %800 = vst [vmem:[#allocation2 + $0x88] sm:$0xff] %v768
          %801 = vst [vmem:[#allocation2 + $0x90] sm:$0xff] %v769
          %802 = vst [vmem:[#allocation2 + $0x98] sm:$0xff] %v770
          %803 = vst [vmem:[#allocation2 + $0xa0] sm:$0xff] %v771
          %804 = vst [vmem:[#allocation2 + $0xa8] sm:$0xff] %v772
          %805 = vst [vmem:[#allocation2 + $0xb0] sm:$0xff] %v773
          %806 = vst [vmem:[#allocation2 + $0xb8] sm:$0xff] %v774
          %807 = vst [vmem:[#allocation2 + $0xc0] sm:$0xff] %v775
          %808 = vst [vmem:[#allocation2 + $0xc8] sm:$0xff] %v776
          %809 = vst [vmem:[#allocation2 + $0xd0] sm:$0xff] %v777
          %810 = vst [vmem:[#allocation2 + $0xd8] sm:$0xff] %v778
          %811 = vst [vmem:[#allocation2 + $0xe0] sm:$0xff] %v779
          %812 = vst [vmem:[#allocation2 + $0xe8] sm:$0xff] %v780
          %813 = vst [vmem:[#allocation2 + $0xf0] sm:$0xff] %v781
          %814 = vst [vmem:[#allocation2 + $0xf8] sm:$0xff] %v782
        $region52: #{tpu_custom_call.1} parent=39 // pred_fallthru
          _
        %v815 = vld [vmem:[#allocation2] sm:$0xff]
        %v816 = vld [vmem:[#allocation2 + $0x8] sm:$0xff]
        %v817 = vld [vmem:[#allocation2 + $0x10] sm:$0xff]
        %v818 = vld [vmem:[#allocation2 + $0x18] sm:$0xff]
        %v819 = vld [vmem:[#allocation2 + $0x20] sm:$0xff]
        %v820 = vld [vmem:[#allocation2 + $0x28] sm:$0xff]
        %v821 = vld [vmem:[#allocation2 + $0x30] sm:$0xff]
        %v822 = vld [vmem:[#allocation2 + $0x38] sm:$0xff]
        %v823 = vld [vmem:[#allocation2 + $0x40] sm:$0xff]
        %v824 = vld [vmem:[#allocation2 + $0x48] sm:$0xff]
        %v825 = vld [vmem:[#allocation2 + $0x50] sm:$0xff]
        %v826 = vld [vmem:[#allocation2 + $0x58] sm:$0xff]
        %v827 = vld [vmem:[#allocation2 + $0x60] sm:$0xff]
        %v828 = vld [vmem:[#allocation2 + $0x68] sm:$0xff]
        %v829 = vld [vmem:[#allocation2 + $0x70] sm:$0xff]
        %v830 = vld [vmem:[#allocation2 + $0x78] sm:$0xff]
        %v831 = vld [vmem:[#allocation2 + $0x80] sm:$0xff]
        %v832 = vld [vmem:[#allocation2 + $0x88] sm:$0xff]
        %v833 = vld [vmem:[#allocation2 + $0x90] sm:$0xff]
        %v834 = vld [vmem:[#allocation2 + $0x98] sm:$0xff]
        %v835 = vld [vmem:[#allocation2 + $0xa0] sm:$0xff]
        %v836 = vld [vmem:[#allocation2 + $0xa8] sm:$0xff]
        %v837 = vld [vmem:[#allocation2 + $0xb0] sm:$0xff]
        %v838 = vld [vmem:[#allocation2 + $0xb8] sm:$0xff]
        %v839 = vld [vmem:[#allocation2 + $0xc0] sm:$0xff]
        %v840 = vld [vmem:[#allocation2 + $0xc8] sm:$0xff]
        %v841 = vld [vmem:[#allocation2 + $0xd0] sm:$0xff]
        %v842 = vld [vmem:[#allocation2 + $0xd8] sm:$0xff]
        %v843 = vld [vmem:[#allocation2 + $0xe0] sm:$0xff]
        %v844 = vld [vmem:[#allocation2 + $0xe8] sm:$0xff]
        %v845 = vld [vmem:[#allocation2 + $0xf0] sm:$0xff]
        %v846 = vld [vmem:[#allocation2 + $0xf8] sm:$0xff]
        %v847 = vld [vmem:[#allocation6] sm:$0xff]
        %v848 = vld [vmem:[#allocation6 + $0x8] sm:$0xff]
        %v849 = vld [vmem:[#allocation6 + $0x10] sm:$0xff]
        %v850 = vld [vmem:[#allocation6 + $0x18] sm:$0xff]
        %v851 = vld [vmem:[#allocation6 + $0x20] sm:$0xff]
        %v852 = vld [vmem:[#allocation6 + $0x28] sm:$0xff]
        %v853 = vld [vmem:[#allocation6 + $0x30] sm:$0xff]
        %v854 = vld [vmem:[#allocation6 + $0x38] sm:$0xff]
        %v855 = vld [vmem:[#allocation6 + $0x40] sm:$0xff]
        %v856 = vld [vmem:[#allocation6 + $0x48] sm:$0xff]
        %v857 = vld [vmem:[#allocation6 + $0x50] sm:$0xff]
        %v858 = vld [vmem:[#allocation6 + $0x58] sm:$0xff]
        %v859 = vld [vmem:[#allocation6 + $0x60] sm:$0xff]
        %v860 = vld [vmem:[#allocation6 + $0x68] sm:$0xff]
        %v861 = vld [vmem:[#allocation6 + $0x70] sm:$0xff]
        %v862 = vld [vmem:[#allocation6 + $0x78] sm:$0xff]
        %v863 = vld [vmem:[#allocation6 + $0x80] sm:$0xff]
        %v864 = vld [vmem:[#allocation6 + $0x88] sm:$0xff]
        %v865 = vld [vmem:[#allocation6 + $0x90] sm:$0xff]
        %v866 = vld [vmem:[#allocation6 + $0x98] sm:$0xff]
        %v867 = vld [vmem:[#allocation6 + $0xa0] sm:$0xff]
        %v868 = vld [vmem:[#allocation6 + $0xa8] sm:$0xff]
        %v869 = vld [vmem:[#allocation6 + $0xb0] sm:$0xff]
        %v870 = vld [vmem:[#allocation6 + $0xb8] sm:$0xff]
        %v871 = vld [vmem:[#allocation6 + $0xc0] sm:$0xff]
        %v872 = vld [vmem:[#allocation6 + $0xc8] sm:$0xff]
        %v873 = vld [vmem:[#allocation6 + $0xd0] sm:$0xff]
        %v874 = vld [vmem:[#allocation6 + $0xd8] sm:$0xff]
        %v875 = vld [vmem:[#allocation6 + $0xe0] sm:$0xff]
        %v876 = vld [vmem:[#allocation6 + $0xe8] sm:$0xff]
        %v877 = vld [vmem:[#allocation6 + $0xf0] sm:$0xff]
        %v878 = vld [vmem:[#allocation6 + $0xf8] sm:$0xff]
        %v879 = vld [vmem:[#allocation6 + $0x100] sm:$0xff]
        %v880 = vld [vmem:[#allocation6 + $0x108] sm:$0xff]
        %v881 = vld [vmem:[#allocation6 + $0x110] sm:$0xff]
        %v882 = vld [vmem:[#allocation6 + $0x118] sm:$0xff]
        %v883 = vld [vmem:[#allocation6 + $0x120] sm:$0xff]
        %v884 = vld [vmem:[#allocation6 + $0x128] sm:$0xff]
        %v885 = vld [vmem:[#allocation6 + $0x130] sm:$0xff]
        %v886 = vld [vmem:[#allocation6 + $0x138] sm:$0xff]
        %v887 = vld [vmem:[#allocation6 + $0x140] sm:$0xff]
        %v888 = vld [vmem:[#allocation6 + $0x148] sm:$0xff]
        %v889 = vld [vmem:[#allocation6 + $0x150] sm:$0xff]
        %v890 = vld [vmem:[#allocation6 + $0x158] sm:$0xff]
        %v891 = vld [vmem:[#allocation6 + $0x160] sm:$0xff]
        %v892 = vld [vmem:[#allocation6 + $0x168] sm:$0xff]
        %v893 = vld [vmem:[#allocation6 + $0x170] sm:$0xff]
        %v894 = vld [vmem:[#allocation6 + $0x178] sm:$0xff]
        %v895 = vld [vmem:[%s312] sm:$0x7]
        %v897 = vlaneseq
        %v898 = vshrl.u32 %v897, 7
        %v899 = vsub.s32 0, %v898
        %v900 = vrot.slane %v895, %v899
        %v901 = vlaneseq
        %v902 = vshrl.u32 %v901, 7
        %v903 = vsub.s32 1, %v902
        %v904 = vrot.slane %v895, %v903
        %v905 = vlaneseq
        %v906 = vshrl.u32 %v905, 7
        %v907 = vsub.s32 2, %v906
        %v908 = vrot.slane %v895, %v907
        %912 = vmatprep.subr.mxu0 %v893
        %913 = vmatpush1.msra.mxu0 %v892
        %914 = vmatprep.subr.mxu0 %v890
        %915 = vmatpush1.msra.mxu0 %v889
        %916 = vmatprep.subr.mxu0 %v887
        %917 = vmatpush1.msra.mxu0 %v886
        %918 = vmatprep.subr.mxu0 %v884
        %919 = vmatpush1.msra.mxu0 %v883
        %920 = vmatprep.subr.mxu0 %v881
        %921 = vmatpush1.msra.mxu0 %v880
        %922 = vmatprep.subr.mxu0 %v878
        %923 = vmatpush1.msra.mxu0 %v877
        %924 = vmatprep.subr.mxu0 %v875
        %925 = vmatpush1.msra.mxu0 %v874
        %926 = vmatprep.subr.mxu0 %v872
        %927 = vmatpush1.msra.mxu0 %v871
        %928 = vmatprep.subr.mxu0 %v869
        %929 = vmatpush1.msra.mxu0 %v868
        %930 = vmatprep.subr.mxu0 %v866
        %931 = vmatpush1.msra.mxu0 %v865
        %932 = vmatprep.subr.mxu0 %v863
        %933 = vmatpush1.msra.mxu0 %v862
        %934 = vmatprep.subr.mxu0 %v860
        %935 = vmatpush1.msra.mxu0 %v859
        %936 = vmatprep.subr.mxu0 %v857
        %937 = vmatpush1.msra.mxu0 %v856
        %938 = vmatprep.subr.mxu0 %v854
        %939 = vmatpush1.msra.mxu0 %v853
        %940 = vmatprep.subr.mxu0 %v851
        %941 = vmatpush1.msra.mxu0 %v850
        %942 = vmatprep.subr.mxu0 %v848
        %943 = vmatpush1.msra.mxu0 %v847
        %944 = vmatprep.subr.mxu0 0.0
        %945 = vmatpush2.msra.mxu0 0.0
        %946 = vmatprep.subr.mxu0 0.0
        %947 = vmatpush2.msra.mxu0 0.0
        %948 = vmatprep.subr.mxu0 0.0
        %949 = vmatpush2.msra.mxu0 0.0
        %950 = vmatprep.subr.mxu0 0.0
        %951 = vmatpush2.msra.mxu0 0.0
        %952 = vmatprep.subr.mxu0 0.0
        %953 = vmatpush2.msra.mxu0 0.0
        %954 = vmatprep.subr.mxu0 0.0
        %955 = vmatpush2.msra.mxu0 0.0
        %956 = vmatprep.subr.mxu0 0.0
        %957 = vmatpush2.msra.mxu0 0.0
        %958 = vmatprep.subr.mxu0 0.0
        %959 = vmatpush2.msra.mxu0 0.0
        %960 = vmatprep.subr.mxu0 0.0
        %961 = vmatpush2.msra.mxu0 0.0
        %962 = vmatprep.subr.mxu0 0.0
        %963 = vmatpush2.msra.mxu0 0.0
        %964 = vmatprep.subr.mxu0 0.0
        %965 = vmatpush2.msra.mxu0 0.0
        %966 = vmatprep.subr.mxu0 0.0
        %967 = vmatpush2.msra.mxu0 0.0
        %968 = vmatprep.subr.mxu0 0.0
        %969 = vmatpush2.msra.mxu0 0.0
        %970 = vmatprep.subr.mxu0 0.0
        %971 = vmatpush2.msra.mxu0 0.0
        %972 = vmatprep.subr.mxu0 0.0
        %973 = vmatpush2.msra.mxu0 0.0
        %974 = vmatprep.subr.mxu0 0.0
        %975 = vmatpush2.msra.mxu0 0.0
        %976 = vmatprep.mubr.f32.mxu0 0.0
        %977 = vmatmul.mubr.f32.gmra.mxu0 %v815
        %v978 = vpop.f32.mrf.mxu0
        %v979 = vadd.f32 %v900, %v978
        %v980 = vpop.f32.mrf.mxu0
        %v981 = vadd.f32 %v904, %v980
        %982 = vmatprep.mubr.f32.mxu0 0.0
        %983 = vmatmul.mubr.f32.gmra.mxu0 %v816
        %v984 = vpop.f32.mrf.mxu0
        %v985 = vadd.f32 %v900, %v984
        %v986 = vpop.f32.mrf.mxu0
        %v987 = vadd.f32 %v904, %v986
        %988 = vmatprep.mubr.f32.mxu0 0.0
        %989 = vmatmul.mubr.f32.gmra.mxu0 %v817
        %v990 = vpop.f32.mrf.mxu0
        %v991 = vadd.f32 %v900, %v990
        %v992 = vpop.f32.mrf.mxu0
        %v993 = vadd.f32 %v904, %v992
        %994 = vmatprep.mubr.f32.mxu0 0.0
        %995 = vmatmul.mubr.f32.gmra.mxu0 %v818
        %v996 = vpop.f32.mrf.mxu0
        %v997 = vadd.f32 %v900, %v996
        %v998 = vpop.f32.mrf.mxu0
        %v999 = vadd.f32 %v904, %v998
        %1000 = vmatprep.mubr.f32.mxu0 0.0
        %1001 = vmatmul.mubr.f32.gmra.mxu0 %v819
        %v1002 = vpop.f32.mrf.mxu0
        %v1003 = vadd.f32 %v900, %v1002
        %v1004 = vpop.f32.mrf.mxu0
        %v1005 = vadd.f32 %v904, %v1004
        %1006 = vmatprep.mubr.f32.mxu0 0.0
        %1007 = vmatmul.mubr.f32.gmra.mxu0 %v820
        %v1008 = vpop.f32.mrf.mxu0
        %v1009 = vadd.f32 %v900, %v1008
        %v1010 = vpop.f32.mrf.mxu0
        %v1011 = vadd.f32 %v904, %v1010
        %1012 = vmatprep.mubr.f32.mxu0 0.0
        %1013 = vmatmul.mubr.f32.gmra.mxu0 %v821
        %v1014 = vpop.f32.mrf.mxu0
        %v1015 = vadd.f32 %v900, %v1014
        %v1016 = vpop.f32.mrf.mxu0
        %v1017 = vadd.f32 %v904, %v1016
        %1018 = vmatprep.mubr.f32.mxu0 0.0
        %1019 = vmatmul.mubr.f32.gmra.mxu0 %v822
        %v1020 = vpop.f32.mrf.mxu0
        %v1021 = vadd.f32 %v900, %v1020
        %v1022 = vpop.f32.mrf.mxu0
        %v1023 = vadd.f32 %v904, %v1022
        %1024 = vmatprep.mubr.f32.mxu0 0.0
        %1025 = vmatmul.mubr.f32.gmra.mxu0 %v823
        %v1026 = vpop.f32.mrf.mxu0
        %v1027 = vadd.f32 %v900, %v1026
        %v1028 = vpop.f32.mrf.mxu0
        %v1029 = vadd.f32 %v904, %v1028
        %1030 = vmatprep.mubr.f32.mxu0 0.0
        %1031 = vmatmul.mubr.f32.gmra.mxu0 %v824
        %v1032 = vpop.f32.mrf.mxu0
        %v1033 = vadd.f32 %v900, %v1032
        %v1034 = vpop.f32.mrf.mxu0
        %v1035 = vadd.f32 %v904, %v1034
        %1036 = vmatprep.mubr.f32.mxu0 0.0
        %1037 = vmatmul.mubr.f32.gmra.mxu0 %v825
        %v1038 = vpop.f32.mrf.mxu0
        %v1039 = vadd.f32 %v900, %v1038
        %v1040 = vpop.f32.mrf.mxu0
        %v1041 = vadd.f32 %v904, %v1040
        %1042 = vmatprep.mubr.f32.mxu0 0.0
        %1043 = vmatmul.mubr.f32.gmra.mxu0 %v826
        %v1044 = vpop.f32.mrf.mxu0
        %v1045 = vadd.f32 %v900, %v1044
        %v1046 = vpop.f32.mrf.mxu0
        %v1047 = vadd.f32 %v904, %v1046
        %1048 = vmatprep.mubr.f32.mxu0 0.0
        %1049 = vmatmul.mubr.f32.gmra.mxu0 %v827
        %v1050 = vpop.f32.mrf.mxu0
        %v1051 = vadd.f32 %v900, %v1050
        %v1052 = vpop.f32.mrf.mxu0
        %v1053 = vadd.f32 %v904, %v1052
        %1054 = vmatprep.mubr.f32.mxu0 0.0
        %1055 = vmatmul.mubr.f32.gmra.mxu0 %v828
        %v1056 = vpop.f32.mrf.mxu0
        %v1057 = vadd.f32 %v900, %v1056
        %v1058 = vpop.f32.mrf.mxu0
        %v1059 = vadd.f32 %v904, %v1058
        %1060 = vmatprep.mubr.f32.mxu0 0.0
        %1061 = vmatmul.mubr.f32.gmra.mxu0 %v829
        %v1062 = vpop.f32.mrf.mxu0
        %v1063 = vadd.f32 %v900, %v1062
        %v1064 = vpop.f32.mrf.mxu0
        %v1065 = vadd.f32 %v904, %v1064
        %1066 = vmatprep.mubr.f32.mxu0 0.0
        %1067 = vmatmul.mubr.f32.gmra.mxu0 %v830
        %v1068 = vpop.f32.mrf.mxu0
        %v1069 = vadd.f32 %v900, %v1068
        %v1070 = vpop.f32.mrf.mxu0
        %v1071 = vadd.f32 %v904, %v1070
        %1072 = vmatprep.mubr.f32.mxu0 0.0
        %1073 = vmatmul.mubr.f32.gmra.mxu0 %v831
        %v1074 = vpop.f32.mrf.mxu0
        %v1075 = vadd.f32 %v900, %v1074
        %v1076 = vpop.f32.mrf.mxu0
        %v1077 = vadd.f32 %v904, %v1076
        %1078 = vmatprep.mubr.f32.mxu0 0.0
        %1079 = vmatmul.mubr.f32.gmra.mxu0 %v832
        %v1080 = vpop.f32.mrf.mxu0
        %v1081 = vadd.f32 %v900, %v1080
        %v1082 = vpop.f32.mrf.mxu0
        %v1083 = vadd.f32 %v904, %v1082
        %1084 = vmatprep.mubr.f32.mxu0 0.0
        %1085 = vmatmul.mubr.f32.gmra.mxu0 %v833
        %v1086 = vpop.f32.mrf.mxu0
        %v1087 = vadd.f32 %v900, %v1086
        %v1088 = vpop.f32.mrf.mxu0
        %v1089 = vadd.f32 %v904, %v1088
        %1090 = vmatprep.mubr.f32.mxu0 0.0
        %1091 = vmatmul.mubr.f32.gmra.mxu0 %v834
        %v1092 = vpop.f32.mrf.mxu0
        %v1093 = vadd.f32 %v900, %v1092
        %v1094 = vpop.f32.mrf.mxu0
        %v1095 = vadd.f32 %v904, %v1094
        %1096 = vmatprep.mubr.f32.mxu0 0.0
        %1097 = vmatmul.mubr.f32.gmra.mxu0 %v835
        %v1098 = vpop.f32.mrf.mxu0
        %v1099 = vadd.f32 %v900, %v1098
        %v1100 = vpop.f32.mrf.mxu0
        %v1101 = vadd.f32 %v904, %v1100
        %1102 = vmatprep.mubr.f32.mxu0 0.0
        %1103 = vmatmul.mubr.f32.gmra.mxu0 %v836
        %v1104 = vpop.f32.mrf.mxu0
        %v1105 = vadd.f32 %v900, %v1104
        %v1106 = vpop.f32.mrf.mxu0
        %v1107 = vadd.f32 %v904, %v1106
        %1108 = vmatprep.mubr.f32.mxu0 0.0
        %1109 = vmatmul.mubr.f32.gmra.mxu0 %v837
        %v1110 = vpop.f32.mrf.mxu0
        %v1111 = vadd.f32 %v900, %v1110
        %v1112 = vpop.f32.mrf.mxu0
        %v1113 = vadd.f32 %v904, %v1112
        %1114 = vmatprep.mubr.f32.mxu0 0.0
        %1115 = vmatmul.mubr.f32.gmra.mxu0 %v838
        %v1116 = vpop.f32.mrf.mxu0
        %v1117 = vadd.f32 %v900, %v1116
        %v1118 = vpop.f32.mrf.mxu0
        %v1119 = vadd.f32 %v904, %v1118
        %1120 = vmatprep.mubr.f32.mxu0 0.0
        %1121 = vmatmul.mubr.f32.gmra.mxu0 %v839
        %v1122 = vpop.f32.mrf.mxu0
        %v1123 = vadd.f32 %v900, %v1122
        %v1124 = vpop.f32.mrf.mxu0
        %v1125 = vadd.f32 %v904, %v1124
        %1126 = vmatprep.mubr.f32.mxu0 0.0
        %1127 = vmatmul.mubr.f32.gmra.mxu0 %v840
        %v1128 = vpop.f32.mrf.mxu0
        %v1129 = vadd.f32 %v900, %v1128
        %v1130 = vpop.f32.mrf.mxu0
        %v1131 = vadd.f32 %v904, %v1130
        %1132 = vmatprep.mubr.f32.mxu0 0.0
        %1133 = vmatmul.mubr.f32.gmra.mxu0 %v841
        %v1134 = vpop.f32.mrf.mxu0
        %v1135 = vadd.f32 %v900, %v1134
        %v1136 = vpop.f32.mrf.mxu0
        %v1137 = vadd.f32 %v904, %v1136
        %1138 = vmatprep.mubr.f32.mxu0 0.0
        %1139 = vmatmul.mubr.f32.gmra.mxu0 %v842
        %v1140 = vpop.f32.mrf.mxu0
        %v1141 = vadd.f32 %v900, %v1140
        %v1142 = vpop.f32.mrf.mxu0
        %v1143 = vadd.f32 %v904, %v1142
        %1144 = vmatprep.mubr.f32.mxu0 0.0
        %1145 = vmatmul.mubr.f32.gmra.mxu0 %v843
        %v1146 = vpop.f32.mrf.mxu0
        %v1147 = vadd.f32 %v900, %v1146
        %v1148 = vpop.f32.mrf.mxu0
        %v1149 = vadd.f32 %v904, %v1148
        %1150 = vmatprep.mubr.f32.mxu0 0.0
        %1151 = vmatmul.mubr.f32.gmra.mxu0 %v844
        %v1152 = vpop.f32.mrf.mxu0
        %v1153 = vadd.f32 %v900, %v1152
        %v1154 = vpop.f32.mrf.mxu0
        %v1155 = vadd.f32 %v904, %v1154
        %1156 = vmatprep.mubr.f32.mxu0 0.0
        %1157 = vmatmul.mubr.f32.gmra.mxu0 %v845
        %v1158 = vpop.f32.mrf.mxu0
        %v1159 = vadd.f32 %v900, %v1158
        %v1160 = vpop.f32.mrf.mxu0
        %v1161 = vadd.f32 %v904, %v1160
        %1162 = vmatprep.mubr.f32.mxu0 0.0
        %1163 = vmatmul.mubr.f32.gmra.mxu0 %v846
        %v1164 = vpop.f32.mrf.mxu0
        %v1165 = vadd.f32 %v900, %v1164
        %v1166 = vpop.f32.mrf.mxu0
        %v1167 = vadd.f32 %v904, %v1166
        %1168 = vdwg.mxu0
        %1169 = vmatprep.subr.mxu0 0.0
        %1170 = vmatpush1.msra.mxu0 %v894
        %1171 = vmatprep.subr.mxu0 0.0
        %1172 = vmatpush1.msra.mxu0 %v891
        %1173 = vmatprep.subr.mxu0 0.0
        %1174 = vmatpush1.msra.mxu0 %v888
        %1175 = vmatprep.subr.mxu0 0.0
        %1176 = vmatpush1.msra.mxu0 %v885
        %1177 = vmatprep.subr.mxu0 0.0
        %1178 = vmatpush1.msra.mxu0 %v882
        %1179 = vmatprep.subr.mxu0 0.0
        %1180 = vmatpush1.msra.mxu0 %v879
        %1181 = vmatprep.subr.mxu0 0.0
        %1182 = vmatpush1.msra.mxu0 %v876
        %1183 = vmatprep.subr.mxu0 0.0
        %1184 = vmatpush1.msra.mxu0 %v873
        %1185 = vmatprep.subr.mxu0 0.0
        %1186 = vmatpush1.msra.mxu0 %v870
        %1187 = vmatprep.subr.mxu0 0.0
        %1188 = vmatpush1.msra.mxu0 %v867
        %1189 = vmatprep.subr.mxu0 0.0
        %1190 = vmatpush1.msra.mxu0 %v864
        %1191 = vmatprep.subr.mxu0 0.0
        %1192 = vmatpush1.msra.mxu0 %v861
        %1193 = vmatprep.subr.mxu0 0.0
        %1194 = vmatpush1.msra.mxu0 %v858
        %1195 = vmatprep.subr.mxu0 0.0
        %1196 = vmatpush1.msra.mxu0 %v855
        %1197 = vmatprep.subr.mxu0 0.0
        %1198 = vmatpush1.msra.mxu0 %v852
        %1199 = vmatprep.subr.mxu0 0.0
        %1200 = vmatpush1.msra.mxu0 %v849
        %1201 = vmatprep.subr.mxu0 0.0
        %1202 = vmatpush2.msra.mxu0 0.0
        %1203 = vmatprep.subr.mxu0 0.0
        %1204 = vmatpush2.msra.mxu0 0.0
        %1205 = vmatprep.subr.mxu0 0.0
        %1206 = vmatpush2.msra.mxu0 0.0
        %1207 = vmatprep.subr.mxu0 0.0
        %1208 = vmatpush2.msra.mxu0 0.0
        %1209 = vmatprep.subr.mxu0 0.0
        %1210 = vmatpush2.msra.mxu0 0.0
        %1211 = vmatprep.subr.mxu0 0.0
        %1212 = vmatpush2.msra.mxu0 0.0
        %1213 = vmatprep.subr.mxu0 0.0
        %1214 = vmatpush2.msra.mxu0 0.0
        %1215 = vmatprep.subr.mxu0 0.0
        %1216 = vmatpush2.msra.mxu0 0.0
        %1217 = vmatprep.subr.mxu0 0.0
        %1218 = vmatpush2.msra.mxu0 0.0
        %1219 = vmatprep.subr.mxu0 0.0
        %1220 = vmatpush2.msra.mxu0 0.0
        %1221 = vmatprep.subr.mxu0 0.0
        %1222 = vmatpush2.msra.mxu0 0.0
        %1223 = vmatprep.subr.mxu0 0.0
        %1224 = vmatpush2.msra.mxu0 0.0
        %1225 = vmatprep.subr.mxu0 0.0
        %1226 = vmatpush2.msra.mxu0 0.0
        %1227 = vmatprep.subr.mxu0 0.0
        %1228 = vmatpush2.msra.mxu0 0.0
        %1229 = vmatprep.subr.mxu0 0.0
        %1230 = vmatpush2.msra.mxu0 0.0
        %1231 = vmatprep.subr.mxu0 0.0
        %1232 = vmatpush2.msra.mxu0 0.0
        %1233 = vmatprep.mubr.f32.mxu0 0.0
        %1234 = vmatmul.mubr.f32.gmra.mxu0 %v815
        %v1235 = vpop.f32.mrf.mxu0
        %v1236 = vadd.f32 %v908, %v1235
        %v1237 = vpop.f32.mrf.mxu0
        %1238 = vmatprep.mubr.f32.mxu0 0.0
        %1239 = vmatmul.mubr.f32.gmra.mxu0 %v816
        %v1240 = vpop.f32.mrf.mxu0
        %v1241 = vadd.f32 %v908, %v1240
        %v1242 = vpop.f32.mrf.mxu0
        %1243 = vmatprep.mubr.f32.mxu0 0.0
        %1244 = vmatmul.mubr.f32.gmra.mxu0 %v817
        %v1245 = vpop.f32.mrf.mxu0
        %v1246 = vadd.f32 %v908, %v1245
        %v1247 = vpop.f32.mrf.mxu0
        %1248 = vmatprep.mubr.f32.mxu0 0.0
        %1249 = vmatmul.mubr.f32.gmra.mxu0 %v818
        %v1250 = vpop.f32.mrf.mxu0
        %v1251 = vadd.f32 %v908, %v1250
        %v1252 = vpop.f32.mrf.mxu0
        %1253 = vmatprep.mubr.f32.mxu0 0.0
        %1254 = vmatmul.mubr.f32.gmra.mxu0 %v819
        %v1255 = vpop.f32.mrf.mxu0
        %v1256 = vadd.f32 %v908, %v1255
        %v1257 = vpop.f32.mrf.mxu0
        %1258 = vmatprep.mubr.f32.mxu0 0.0
        %1259 = vmatmul.mubr.f32.gmra.mxu0 %v820
        %v1260 = vpop.f32.mrf.mxu0
        %v1261 = vadd.f32 %v908, %v1260
        %v1262 = vpop.f32.mrf.mxu0
        %1263 = vmatprep.mubr.f32.mxu0 0.0
        %1264 = vmatmul.mubr.f32.gmra.mxu0 %v821
        %v1265 = vpop.f32.mrf.mxu0
        %v1266 = vadd.f32 %v908, %v1265
        %v1267 = vpop.f32.mrf.mxu0
        %1268 = vmatprep.mubr.f32.mxu0 0.0
        %1269 = vmatmul.mubr.f32.gmra.mxu0 %v822
        %v1270 = vpop.f32.mrf.mxu0
        %v1271 = vadd.f32 %v908, %v1270
        %v1272 = vpop.f32.mrf.mxu0
        %1273 = vmatprep.mubr.f32.mxu0 0.0
        %1274 = vmatmul.mubr.f32.gmra.mxu0 %v823
        %v1275 = vpop.f32.mrf.mxu0
        %v1276 = vadd.f32 %v908, %v1275
        %v1277 = vpop.f32.mrf.mxu0
        %1278 = vmatprep.mubr.f32.mxu0 0.0
        %1279 = vmatmul.mubr.f32.gmra.mxu0 %v824
        %v1280 = vpop.f32.mrf.mxu0
        %v1281 = vadd.f32 %v908, %v1280
        %v1282 = vpop.f32.mrf.mxu0
        %1283 = vmatprep.mubr.f32.mxu0 0.0
        %1284 = vmatmul.mubr.f32.gmra.mxu0 %v825
        %v1285 = vpop.f32.mrf.mxu0
        %v1286 = vadd.f32 %v908, %v1285
        %v1287 = vpop.f32.mrf.mxu0
        %1288 = vmatprep.mubr.f32.mxu0 0.0
        %1289 = vmatmul.mubr.f32.gmra.mxu0 %v826
        %v1290 = vpop.f32.mrf.mxu0
        %v1291 = vadd.f32 %v908, %v1290
        %v1292 = vpop.f32.mrf.mxu0
        %1293 = vmatprep.mubr.f32.mxu0 0.0
        %1294 = vmatmul.mubr.f32.gmra.mxu0 %v827
        %v1295 = vpop.f32.mrf.mxu0
        %v1296 = vadd.f32 %v908, %v1295
        %v1297 = vpop.f32.mrf.mxu0
        %1298 = vmatprep.mubr.f32.mxu0 0.0
        %1299 = vmatmul.mubr.f32.gmra.mxu0 %v828
        %v1300 = vpop.f32.mrf.mxu0
        %v1301 = vadd.f32 %v908, %v1300
        %v1302 = vpop.f32.mrf.mxu0
        %1303 = vmatprep.mubr.f32.mxu0 0.0
        %1304 = vmatmul.mubr.f32.gmra.mxu0 %v829
        %v1305 = vpop.f32.mrf.mxu0
        %v1306 = vadd.f32 %v908, %v1305
        %v1307 = vpop.f32.mrf.mxu0
        %1308 = vmatprep.mubr.f32.mxu0 0.0
        %1309 = vmatmul.mubr.f32.gmra.mxu0 %v830
        %v1310 = vpop.f32.mrf.mxu0
        %v1311 = vadd.f32 %v908, %v1310
        %v1312 = vpop.f32.mrf.mxu0
        %1313 = vmatprep.mubr.f32.mxu0 0.0
        %1314 = vmatmul.mubr.f32.gmra.mxu0 %v831
        %v1315 = vpop.f32.mrf.mxu0
        %v1316 = vadd.f32 %v908, %v1315
        %v1317 = vpop.f32.mrf.mxu0
        %1318 = vmatprep.mubr.f32.mxu0 0.0
        %1319 = vmatmul.mubr.f32.gmra.mxu0 %v832
        %v1320 = vpop.f32.mrf.mxu0
        %v1321 = vadd.f32 %v908, %v1320
        %v1322 = vpop.f32.mrf.mxu0
        %1323 = vmatprep.mubr.f32.mxu0 0.0
        %1324 = vmatmul.mubr.f32.gmra.mxu0 %v833
        %v1325 = vpop.f32.mrf.mxu0
        %v1326 = vadd.f32 %v908, %v1325
        %v1327 = vpop.f32.mrf.mxu0
        %1328 = vmatprep.mubr.f32.mxu0 0.0
        %1329 = vmatmul.mubr.f32.gmra.mxu0 %v834
        %v1330 = vpop.f32.mrf.mxu0
        %v1331 = vadd.f32 %v908, %v1330
        %v1332 = vpop.f32.mrf.mxu0
        %1333 = vmatprep.mubr.f32.mxu0 0.0
        %1334 = vmatmul.mubr.f32.gmra.mxu0 %v835
        %v1335 = vpop.f32.mrf.mxu0
        %v1336 = vadd.f32 %v908, %v1335
        %v1337 = vpop.f32.mrf.mxu0
        %1338 = vmatprep.mubr.f32.mxu0 0.0
        %1339 = vmatmul.mubr.f32.gmra.mxu0 %v836
        %v1340 = vpop.f32.mrf.mxu0
        %v1341 = vadd.f32 %v908, %v1340
        %v1342 = vpop.f32.mrf.mxu0
        %1343 = vmatprep.mubr.f32.mxu0 0.0
        %1344 = vmatmul.mubr.f32.gmra.mxu0 %v837
        %v1345 = vpop.f32.mrf.mxu0
        %v1346 = vadd.f32 %v908, %v1345
        %v1347 = vpop.f32.mrf.mxu0
        %1348 = vmatprep.mubr.f32.mxu0 0.0
        %1349 = vmatmul.mubr.f32.gmra.mxu0 %v838
        %v1350 = vpop.f32.mrf.mxu0
        %v1351 = vadd.f32 %v908, %v1350
        %v1352 = vpop.f32.mrf.mxu0
        %1353 = vmatprep.mubr.f32.mxu0 0.0
        %1354 = vmatmul.mubr.f32.gmra.mxu0 %v839
        %v1355 = vpop.f32.mrf.mxu0
        %v1356 = vadd.f32 %v908, %v1355
        %v1357 = vpop.f32.mrf.mxu0
        %1358 = vmatprep.mubr.f32.mxu0 0.0
        %1359 = vmatmul.mubr.f32.gmra.mxu0 %v840
        %v1360 = vpop.f32.mrf.mxu0
        %v1361 = vadd.f32 %v908, %v1360
        %v1362 = vpop.f32.mrf.mxu0
        %1363 = vmatprep.mubr.f32.mxu0 0.0
        %1364 = vmatmul.mubr.f32.gmra.mxu0 %v841
        %v1365 = vpop.f32.mrf.mxu0
        %v1366 = vadd.f32 %v908, %v1365
        %v1367 = vpop.f32.mrf.mxu0
        %1368 = vmatprep.mubr.f32.mxu0 0.0
        %1369 = vmatmul.mubr.f32.gmra.mxu0 %v842
        %v1370 = vpop.f32.mrf.mxu0
        %v1371 = vadd.f32 %v908, %v1370
        %v1372 = vpop.f32.mrf.mxu0
        %1373 = vmatprep.mubr.f32.mxu0 0.0
        %1374 = vmatmul.mubr.f32.gmra.mxu0 %v843
        %v1375 = vpop.f32.mrf.mxu0
        %v1376 = vadd.f32 %v908, %v1375
        %v1377 = vpop.f32.mrf.mxu0
        %1378 = vmatprep.mubr.f32.mxu0 0.0
        %1379 = vmatmul.mubr.f32.gmra.mxu0 %v844
        %v1380 = vpop.f32.mrf.mxu0
        %v1381 = vadd.f32 %v908, %v1380
        %v1382 = vpop.f32.mrf.mxu0
        %1383 = vmatprep.mubr.f32.mxu0 0.0
        %1384 = vmatmul.mubr.f32.gmra.mxu0 %v845
        %v1385 = vpop.f32.mrf.mxu0
        %v1386 = vadd.f32 %v908, %v1385
        %v1387 = vpop.f32.mrf.mxu0
        %1388 = vmatprep.mubr.f32.mxu0 0.0
        %1389 = vmatmul.mubr.f32.gmra.mxu0 %v846
        %v1390 = vpop.f32.mrf.mxu0
        %v1391 = vadd.f32 %v908, %v1390
        %v1392 = vpop.f32.mrf.mxu0
        %1393 = vdwg.mxu0
        %1394 = vst [vmem:[%s306] sm:$0xff] %v979
        %1395 = vst [vmem:[%s306 + $0x8] sm:$0xff] %v981
        %1396 = vst [vmem:[%s306 + $0x10] sm:$0xff] %v1236
        %1397 = vst [vmem:[%s306 + $0x18] sm:$0xff] %v985
        %1398 = vst [vmem:[%s306 + $0x20] sm:$0xff] %v987
        %1399 = vst [vmem:[%s306 + $0x28] sm:$0xff] %v1241
        %1400 = vst [vmem:[%s306 + $0x30] sm:$0xff] %v991
        %1401 = vst [vmem:[%s306 + $0x38] sm:$0xff] %v993
        %1402 = vst [vmem:[%s306 + $0x40] sm:$0xff] %v1246
        %1403 = vst [vmem:[%s306 + $0x48] sm:$0xff] %v997
        %1404 = vst [vmem:[%s306 + $0x50] sm:$0xff] %v999
        %1405 = vst [vmem:[%s306 + $0x58] sm:$0xff] %v1251
        %1406 = vst [vmem:[%s306 + $0x60] sm:$0xff] %v1003
        %1407 = vst [vmem:[%s306 + $0x68] sm:$0xff] %v1005
        %1408 = vst [vmem:[%s306 + $0x70] sm:$0xff] %v1256
        %1409 = vst [vmem:[%s306 + $0x78] sm:$0xff] %v1009
        %1410 = vst [vmem:[%s306 + $0x80] sm:$0xff] %v1011
        %1411 = vst [vmem:[%s306 + $0x88] sm:$0xff] %v1261
        %1412 = vst [vmem:[%s306 + $0x90] sm:$0xff] %v1015
        %1413 = vst [vmem:[%s306 + $0x98] sm:$0xff] %v1017
        %1414 = vst [vmem:[%s306 + $0xa0] sm:$0xff] %v1266
        %1415 = vst [vmem:[%s306 + $0xa8] sm:$0xff] %v1021
        %1416 = vst [vmem:[%s306 + $0xb0] sm:$0xff] %v1023
        %1417 = vst [vmem:[%s306 + $0xb8] sm:$0xff] %v1271
        %1418 = vst [vmem:[%s306 + $0xc0] sm:$0xff] %v1027
        %1419 = vst [vmem:[%s306 + $0xc8] sm:$0xff] %v1029
        %1420 = vst [vmem:[%s306 + $0xd0] sm:$0xff] %v1276
        %1421 = vst [vmem:[%s306 + $0xd8] sm:$0xff] %v1033
        %1422 = vst [vmem:[%s306 + $0xe0] sm:$0xff] %v1035
        %1423 = vst [vmem:[%s306 + $0xe8] sm:$0xff] %v1281
        %1424 = vst [vmem:[%s306 + $0xf0] sm:$0xff] %v1039
        %1425 = vst [vmem:[%s306 + $0xf8] sm:$0xff] %v1041
        %1426 = vst [vmem:[%s306 + $0x100] sm:$0xff] %v1286
        %1427 = vst [vmem:[%s306 + $0x108] sm:$0xff] %v1045
        %1428 = vst [vmem:[%s306 + $0x110] sm:$0xff] %v1047
        %1429 = vst [vmem:[%s306 + $0x118] sm:$0xff] %v1291
        %1430 = vst [vmem:[%s306 + $0x120] sm:$0xff] %v1051
        %1431 = vst [vmem:[%s306 + $0x128] sm:$0xff] %v1053
        %1432 = vst [vmem:[%s306 + $0x130] sm:$0xff] %v1296
        %1433 = vst [vmem:[%s306 + $0x138] sm:$0xff] %v1057
        %1434 = vst [vmem:[%s306 + $0x140] sm:$0xff] %v1059
        %1435 = vst [vmem:[%s306 + $0x148] sm:$0xff] %v1301
        %1436 = vst [vmem:[%s306 + $0x150] sm:$0xff] %v1063
        %1437 = vst [vmem:[%s306 + $0x158] sm:$0xff] %v1065
        %1438 = vst [vmem:[%s306 + $0x160] sm:$0xff] %v1306
        %1439 = vst [vmem:[%s306 + $0x168] sm:$0xff] %v1069
        %1440 = vst [vmem:[%s306 + $0x170] sm:$0xff] %v1071
        %1441 = vst [vmem:[%s306 + $0x178] sm:$0xff] %v1311
        %1442 = vst [vmem:[%s306 + $0x180] sm:$0xff] %v1075
        %1443 = vst [vmem:[%s306 + $0x188] sm:$0xff] %v1077
        %1444 = vst [vmem:[%s306 + $0x190] sm:$0xff] %v1316
        %1445 = vst [vmem:[%s306 + $0x198] sm:$0xff] %v1081
        %1446 = vst [vmem:[%s306 + $0x1a0] sm:$0xff] %v1083
        %1447 = vst [vmem:[%s306 + $0x1a8] sm:$0xff] %v1321
        %1448 = vst [vmem:[%s306 + $0x1b0] sm:$0xff] %v1087
        %1449 = vst [vmem:[%s306 + $0x1b8] sm:$0xff] %v1089
        %1450 = vst [vmem:[%s306 + $0x1c0] sm:$0xff] %v1326
        %1451 = vst [vmem:[%s306 + $0x1c8] sm:$0xff] %v1093
        %1452 = vst [vmem:[%s306 + $0x1d0] sm:$0xff] %v1095
        %1453 = vst [vmem:[%s306 + $0x1d8] sm:$0xff] %v1331
        %1454 = vst [vmem:[%s306 + $0x1e0] sm:$0xff] %v1099
        %1455 = vst [vmem:[%s306 + $0x1e8] sm:$0xff] %v1101
        %1456 = vst [vmem:[%s306 + $0x1f0] sm:$0xff] %v1336
        %1457 = vst [vmem:[%s306 + $0x1f8] sm:$0xff] %v1105
        %1458 = vst [vmem:[%s306 + $0x200] sm:$0xff] %v1107
        %1459 = vst [vmem:[%s306 + $0x208] sm:$0xff] %v1341
        %1460 = vst [vmem:[%s306 + $0x210] sm:$0xff] %v1111
        %1461 = vst [vmem:[%s306 + $0x218] sm:$0xff] %v1113
        %1462 = vst [vmem:[%s306 + $0x220] sm:$0xff] %v1346
        %1463 = vst [vmem:[%s306 + $0x228] sm:$0xff] %v1117
        %1464 = vst [vmem:[%s306 + $0x230] sm:$0xff] %v1119
        %1465 = vst [vmem:[%s306 + $0x238] sm:$0xff] %v1351
        %1466 = vst [vmem:[%s306 + $0x240] sm:$0xff] %v1123
        %1467 = vst [vmem:[%s306 + $0x248] sm:$0xff] %v1125
        %1468 = vst [vmem:[%s306 + $0x250] sm:$0xff] %v1356
        %1469 = vst [vmem:[%s306 + $0x258] sm:$0xff] %v1129
        %1470 = vst [vmem:[%s306 + $0x260] sm:$0xff] %v1131
        %1471 = vst [vmem:[%s306 + $0x268] sm:$0xff] %v1361
        %1472 = vst [vmem:[%s306 + $0x270] sm:$0xff] %v1135
        %1473 = vst [vmem:[%s306 + $0x278] sm:$0xff] %v1137
        %1474 = vst [vmem:[%s306 + $0x280] sm:$0xff] %v1366
        %1475 = vst [vmem:[%s306 + $0x288] sm:$0xff] %v1141
        %1476 = vst [vmem:[%s306 + $0x290] sm:$0xff] %v1143
        %1477 = vst [vmem:[%s306 + $0x298] sm:$0xff] %v1371
        %1478 = vst [vmem:[%s306 + $0x2a0] sm:$0xff] %v1147
        %1479 = vst [vmem:[%s306 + $0x2a8] sm:$0xff] %v1149
        %1480 = vst [vmem:[%s306 + $0x2b0] sm:$0xff] %v1376
        %1481 = vst [vmem:[%s306 + $0x2b8] sm:$0xff] %v1153
        %1482 = vst [vmem:[%s306 + $0x2c0] sm:$0xff] %v1155
        %1483 = vst [vmem:[%s306 + $0x2c8] sm:$0xff] %v1381
        %1484 = vst [vmem:[%s306 + $0x2d0] sm:$0xff] %v1159
        %1485 = vst [vmem:[%s306 + $0x2d8] sm:$0xff] %v1161
        %1486 = vst [vmem:[%s306 + $0x2e0] sm:$0xff] %v1386
        %1487 = vst [vmem:[%s306 + $0x2e8] sm:$0xff] %v1165
        %1488 = vst [vmem:[%s306 + $0x2f0] sm:$0xff] %v1167
        %1489 = vst [vmem:[%s306 + $0x2f8] sm:$0xff] %v1391
        %s1490 = sand.u32 %s176, 1
        %s1491 = scalar_lea.sflag [#allocation5], %s1490
        %s1492 = sand.u32 %s176, 1
        %s1493 = smul.addr %s1492, 768
        %s1494 = scalar_lea.vmem [#allocation8], %s1493
        // Predicated region
        $region53: #{tpu_custom_call.1} parent=39 // pred_check
          %p1495 = pneg %p186
        $region54: #{tpu_custom_call.1} parent=39 // pred_check_branch
          %1497 = sbr.rel (%p1495) target = $region56
        $region55: #{tpu_custom_call.1} parent=39 // pred_region
          %s1498 = smul.u32 32, %s29
          %s1499 = smul.u32 3, %s30
          %s1501 = ssub.s32 12288, 12288
          %1502 = vsyncadd %s1491, %s1501
          %s1503 = smul.addr %s1498, 3
          %s1504 = sadd.s32 %s1499, %s1503
          %s1505 = smul.addr %s28, 96
          %s1506 = sadd.s32 %s1504, %s1505
          %s1507 = smul.addr %s1506, 128
          %s1508 = scalar_lea.hbm %s5, %s1507
          %s1509 = sshll.u32 %s1494, 4
          %s1510 = int_to_ptr.vmem [resolvable:$true] %s1509
          %1515 = dma.vmem_to_hbm [thread:$0]  %s1510, 12288, %s1508, %s1491, 384, 384, 24
        $region56: #{tpu_custom_call.1} parent=39 // pred_fallthru
          _
      $region40: #{tpu_custom_call.1} parent=5 // pred_fallthru
        _
      %p1516 = scmp.le.s32.totalorder 2, %s18
      // Predicated region
      $region57: #{tpu_custom_call.1} parent=5 // pred_check
        %p1517 = pneg %p1516
      $region58: #{tpu_custom_call.1} parent=5 // pred_check_branch
        %1519 = sbr.rel (%p1517) target = $region60
      $region59: #{tpu_custom_call.1} parent=5 // pred_region
        %s1520 = ssub.s32 %s18, 2
        // Predicated region
        $region61: #{tpu_custom_call.1} parent=59 // pred_check
          %p1521 = pneg %p192
        $region62: #{tpu_custom_call.1} parent=59 // pred_check_branch
          %1523 = sbr.rel (%p1521) target = $region64
        $region63: #{tpu_custom_call.1} parent=59 // pred_region
          %s1524 = sand.u32 %s177, 1
          %s1525 = scalar_lea.sflag [#allocation5], %s1524
          %s1526 = sand.u32 %s177, 1
          %s1527 = smul.addr %s1526, 768
          %s1528 = scalar_lea.vmem [#allocation8], %s1527
          %1529 = dma.done %s1525, 12288
        $region64: #{tpu_custom_call.1} parent=59 // pred_fallthru
          _
      $region60: #{tpu_custom_call.1} parent=5 // pred_fallthru
        _
    $region6: #{tpu_custom_call.1} parent=1 // loop_footer
      %s22 = sadd.s32 1, %s18
    $region7: #{tpu_custom_call.1} parent=1 // loop_footer_branch
      %17 = sbr.rel target = $region3
    $region8: #{tpu_custom_call.1} parent=1 // loop_exit
      _
    %1530 = vsyncpa [#allocation4], 1
    %s1531 = scalar_lea.sflag [#allocation4], 1
    %1532 = vsyncpa %s1531, 1
    %1533 = vsyncpa [#allocation7], 1
    %1534 = vsyncpa [#allocation5], 1
    %s1535 = scalar_lea.sflag [#allocation5], 1
    %1536 = vsyncpa %s1535, 1

</llo_original>
